<compile_context>
chip_gen: v5e
topology: v5e:2x2
jax: 0.10.0
libtpu: 0.0.40
codegen_flags: <defaults>
</compile_context>

<pallas_src>
import jax
import jax.numpy as jnp
from jax.experimental import pallas as pl
from jax.experimental.pallas import tpu as pltpu

D_IN = 28 * 28        # 784
D_H = 200
D_Z = 20

LANE = 128
SUBLANE = 8

D_IN_P = 896          # 784 -> 7 * 128
D_H_P = 256           # 200 -> 2 * 128
D_Z_P = LANE          # padded latent width (z, eps, mu half, logvar half)
D_MV_P = 2 * LANE     # fused [mu | logvar] output: mu in lanes [0,128), logvar in [128,256)


def _round_up(n, m):
    return ((n + m - 1) // m) * m


def vae_forward_kernel(x_ref, eps_ref,
                       w1_ref, b1_ref,
                       w2_ref, b2_ref,
                       w3_ref, b3_ref,
                       w4_ref, b4_ref,
                       xrec_ref, muvar_ref):
    f32 = jnp.float32
    bf16 = jnp.bfloat16

    x = x_ref[...]                                                      # (TB, 896) f32

    # ---- encode ----
    h1 = jnp.dot(x.astype(bf16), w1_ref[...], preferred_element_type=f32) + b1_ref[...]
    h1 = jnp.maximum(h1, 0.0)                                           # (TB, 256) f32

    # fused mu/logvar matmul: single MXU pass, single lane-dense store
    muvar = jnp.dot(h1.astype(bf16), w2_ref[...], preferred_element_type=f32) + b2_ref[...]
    muvar_ref[...] = muvar                                              # (TB, 256)

    # ---- reparametrize: z = mu + eps * exp(0.5 * logvar) ----
    mu_p = muvar[:, :D_Z_P]        # (TB, 128) vreg-aligned split (lane offset 0)
    logvar_p = muvar[:, D_Z_P:]    # (TB, 128) vreg-aligned split (lane offset 128)
    std = jnp.exp(0.5 * logvar_p)  # padded lanes: exp(0) = 1
    z = mu_p + eps_ref[...] * std  # padded lanes: 0 (eps zero-padded, mu pad = 0)

    # ---- decode ----
    h3 = jnp.dot(z.astype(bf16), w3_ref[...], preferred_element_type=f32) + b3_ref[...]
    h3 = jnp.maximum(h3, 0.0)                                           # (TB, 256) f32
    logits = jnp.dot(h3.astype(bf16), w4_ref[...], preferred_element_type=f32) + b4_ref[...]
    xrec_ref[...] = jax.nn.sigmoid(logits)                              # (TB, 896) lane-dense


def vae_forward(x, eps, params, tile_b=256):
    """x: (B, 1, 28, 28) f32; eps: (B, D_Z) f32 (the randn_like noise).

    Returns (x_rec (B,1,784), mu (B,1,20), logvar (B,1,20)) like the PyTorch module.
    """
    B = x.shape[0]
    x_flat = x.reshape(B, D_IN).astype(jnp.float32)
    eps = eps.astype(jnp.float32)

    # Batch tile: large (256) to feed the MXU / amortize grid overhead; clamp + pad for small B.
    tile_b = max(SUBLANE, min(int(tile_b), _round_up(B, SUBLANE)))
    B_pad = _round_up(B, tile_b)

    x_p = jnp.zeros((B_pad, D_IN_P), jnp.float32).at[:B, :D_IN].set(x_flat)
    eps_p = jnp.zeros((B_pad, D_Z_P), jnp.float32).at[:B, :D_Z].set(eps)

    grid = (B_pad // tile_b,)

    def act_spec(width):
        return pl.BlockSpec((tile_b, width), lambda i: (i, 0))

    def resident(arr):   # full-size block, constant index map -> stays VMEM-resident
        return pl.BlockSpec(arr.shape, lambda i: (0, 0))

    args = (x_p, eps_p,
            params["w1"], params["b1"],
            params["w2"], params["b2"],
            params["w3"], params["b3"],
            params["w4"], params["b4"])

    in_specs = [act_spec(D_IN_P), act_spec(D_Z_P)] + [resident(a) for a in args[2:]]
    out_specs = (act_spec(D_IN_P), act_spec(D_MV_P))

    xrec_p, muvar_p = pl.pallas_call(
        vae_forward_kernel,
        grid=grid,
        in_specs=in_specs,
        out_specs=out_specs,
        out_shape=(
            jax.ShapeDtypeStruct((B_pad, D_IN_P), jnp.float32),
            jax.ShapeDtypeStruct((B_pad, D_MV_P), jnp.float32),
        ),
        compiler_params=pltpu.CompilerParams(
            dimension_semantics=("parallel",),   # megacore sharding of the batch axis on v7x
        ),
    )(*args)

    # Slice padding off and match PyTorch output shapes (x.view(-1, 1, 784) keeps a mid dim of 1).
    xrec = xrec_p[:B, :D_IN].reshape(B, 1, D_IN)
    mu = muvar_p[:B, :D_Z].reshape(B, 1, D_Z)
    logvar = muvar_p[:B, D_Z_P:D_Z_P + D_Z].reshape(B, 1, D_Z)
    return xrec, mu, logvar


# ---------------- parameter construction ----------------

def _linear_init(key, fan_in, fan_out):
    """Deterministic nn.Linear-style init: U(-1/sqrt(fan_in), 1/sqrt(fan_in))."""
    kw, kb = jax.random.split(key)
    bound = 1.0 / jnp.sqrt(float(fan_in))
    w = jax.random.uniform(kw, (fan_in, fan_out), jnp.float32, -bound, bound)  # (in, out)
    b = jax.random.uniform(kb, (fan_out,), jnp.float32, -bound, bound)
    return w, b


def _pad_weight(w, rows, cols):
    out = jnp.zeros((rows, cols), jnp.float32).at[:w.shape[0], :w.shape[1]].set(w)
    return out.astype(jnp.bfloat16)


def _pad_bias(b, cols):
    return jnp.zeros((1, cols), jnp.float32).at[0, :b.shape[0]].set(b)


def init_params(key):
    k1, k21, k22, k3, k4 = jax.random.split(key, 5)
    w1, b1 = _linear_init(k1, D_IN, D_H)
    w21, b21 = _linear_init(k21, D_H, D_Z)
    w22, b22 = _linear_init(k22, D_H, D_Z)
    w3, b3 = _linear_init(k3, D_Z, D_H)
    w4, b4 = _linear_init(k4, D_H, D_IN)

    raw = dict(w1=w1, b1=b1, w21=w21, b21=b21, w22=w22, b22=b22,
               w3=w3, b3=b3, w4=w4, b4=b4)

    # Fused mu/logvar weight: mu -> lanes [0,20), logvar -> lanes [128,148); rest zero.
    w2 = jnp.zeros((D_H_P, D_MV_P), jnp.float32)
    w2 = w2.at[:D_H, :D_Z].set(w21).at[:D_H, D_Z_P:D_Z_P + D_Z].set(w22)
    b2 = jnp.zeros((1, D_MV_P), jnp.float32)
    b2 = b2.at[0, :D_Z].set(b21).at[0, D_Z_P:D_Z_P + D_Z].set(b22)

    packed = dict(
        w1=_pad_weight(w1, D_IN_P, D_H_P), b1=_pad_bias(b1, D_H_P),
        w2=w2.astype(jnp.bfloat16),        b2=b2,
        w3=_pad_weight(w3, D_Z_P, D_H_P),  b3=_pad_bias(b3, D_H_P),
        w4=_pad_weight(w4, D_H_P, D_IN_P), b4=_pad_bias(b4, D_IN_P),
    )
    return packed, raw


def vae_reference(x, eps, raw):
    """Pure-JAX reference mirroring the kernel's bf16 weight/activation storage."""
    B = x.shape[0]
    xf = x.reshape(B, D_IN).astype(jnp.float32)

    def lin(a, w, b):
        a16 = a.astype(jnp.bfloat16).astype(jnp.float32)
        w16 = w.astype(jnp.bfloat16).astype(jnp.float32)
        return jnp.dot(a16, w16, preferred_element_type=jnp.float32) + b

    h1 = jnp.maximum(lin(xf, raw["w1"], raw["b1"]), 0.0)
    mu = lin(h1, raw["w21"], raw["b21"])
    logvar = lin(h1, raw["w22"], raw["b22"])
    z = mu + eps * jnp.exp(0.5 * logvar)
    h3 = jnp.maximum(lin(z, raw["w3"], raw["b3"]), 0.0)
    xrec = jax.nn.sigmoid(lin(h3, raw["w4"], raw["b4"]))
    return (xrec.reshape(B, 1, D_IN),
            mu.reshape(B, 1, D_Z),
            logvar.reshape(B, 1, D_Z))


if __name__ == "__main__":
    key = jax.random.PRNGKey(0)
    k_params, k_x, k_eps = jax.random.split(key, 3)

    B = 8
    params, raw = init_params(k_params)
    x = jax.random.uniform(k_x, (B, 1, 28, 28), jnp.float32)   # image-like input in [0,1)
    # TODO(synk): torch.randn_like noise is passed in explicitly (no in-kernel RNG needed here).
    eps = jax.random.normal(k_eps, (B, D_Z), jnp.float32)

    x_rec, mu, logvar = vae_forward(x, eps, params)
    jax.block_until_ready((x_rec, mu, logvar))

    # shape / range sanity
    assert x_rec.shape == (B, 1, D_IN)
    assert mu.shape == (B, 1, D_Z)
    assert logvar.shape == (B, 1, D_Z)
    assert bool(jnp.all(x_rec >= 0.0)) and bool(jnp.all(x_rec <= 1.0))

    # numerical sanity vs pure-JAX reference (same bf16 weight storage)
    xr_ref, mu_ref, lv_ref = vae_reference(x, eps, raw)
    assert bool(jnp.allclose(x_rec, xr_ref, atol=1e-2, rtol=1e-2))
    assert bool(jnp.allclose(mu, mu_ref, atol=1e-2, rtol=1e-2))
    assert bool(jnp.allclose(logvar, lv_ref, atol=1e-2, rtol=1e-2))

    print("KERNEL_OK")
</pallas_src>

<mosaic_0001>
module attributes {stable_mosaic.version = 11 : i64} {
  func.func @vae_forward_kernel(%arg0: i32, %arg1: memref<8x896xf32, #tpu.memory_space<vmem>>, %arg2: memref<8x128xf32, #tpu.memory_space<vmem>>, %arg3: memref<896x256xbf16, #tpu.memory_space<vmem>>, %arg4: memref<1x256xf32, #tpu.memory_space<vmem>>, %arg5: memref<256x256xbf16, #tpu.memory_space<vmem>>, %arg6: memref<1x256xf32, #tpu.memory_space<vmem>>, %arg7: memref<128x256xbf16, #tpu.memory_space<vmem>>, %arg8: memref<1x256xf32, #tpu.memory_space<vmem>>, %arg9: memref<256x896xbf16, #tpu.memory_space<vmem>>, %arg10: memref<1x896xf32, #tpu.memory_space<vmem>>, %arg11: memref<8x896xf32, #tpu.memory_space<vmem>>, %arg12: memref<8x256xf32, #tpu.memory_space<vmem>>) attributes {dimension_semantics = [#tpu.dimension_semantics<parallel>], iteration_bounds = array<i64: 1>, scalar_prefetch = 0 : i64, scratch_operands = 0 : i64, tpu.core_type = #tpu.core_type<tc>, window_params = [{transform_indices = @transform_0, window_bounds = array<i64: 8, 896>}, {transform_indices = @transform_1, window_bounds = array<i64: 8, 128>}, {pipeline_mode = #tpu.pipeline_mode<synchronous>, transform_indices = @transform_2, window_bounds = array<i64: 896, 256>}, {pipeline_mode = #tpu.pipeline_mode<synchronous>, transform_indices = @transform_3, window_bounds = array<i64: 1, 256>}, {pipeline_mode = #tpu.pipeline_mode<synchronous>, transform_indices = @transform_4, window_bounds = array<i64: 256, 256>}, {pipeline_mode = #tpu.pipeline_mode<synchronous>, transform_indices = @transform_5, window_bounds = array<i64: 1, 256>}, {pipeline_mode = #tpu.pipeline_mode<synchronous>, transform_indices = @transform_6, window_bounds = array<i64: 128, 256>}, {pipeline_mode = #tpu.pipeline_mode<synchronous>, transform_indices = @transform_7, window_bounds = array<i64: 1, 256>}, {pipeline_mode = #tpu.pipeline_mode<synchronous>, transform_indices = @transform_8, window_bounds = array<i64: 256, 896>}, {pipeline_mode = #tpu.pipeline_mode<synchronous>, transform_indices = @transform_9, window_bounds = array<i64: 1, 896>}, {transform_indices = @transform_10, window_bounds = array<i64: 8, 896>}, {transform_indices = @transform_11, window_bounds = array<i64: 8, 256>}]} {
    %c0 = arith.constant 0 : index
    %c0_0 = arith.constant 0 : index
    %0 = vector.load %arg1[%c0, %c0_0] : memref<8x896xf32, #tpu.memory_space<vmem>>, vector<8x896xf32>
    %1 = arith.truncf %0 : vector<8x896xf32> to vector<8x896xbf16>
    %c0_1 = arith.constant 0 : index
    %c0_2 = arith.constant 0 : index
    %2 = vector.load %arg3[%c0_1, %c0_2] : memref<896x256xbf16, #tpu.memory_space<vmem>>, vector<896x256xbf16>
    %cst = arith.constant dense<0.000000e+00> : vector<8x256xf32>
    %3 = tpu.matmul %1, %2, %cst {dimension_numbers = #tpu.dot_dimension_numbers<[1], [0], [0], [1], [0, 0, 1, 1], [], []>} : vector<8x896xbf16>, vector<896x256xbf16>, vector<8x256xf32> -> vector<8x256xf32>
    %c0_3 = arith.constant 0 : index
    %c0_4 = arith.constant 0 : index
    %4 = vector.load %arg4[%c0_3, %c0_4] : memref<1x256xf32, #tpu.memory_space<vmem>>, vector<1x256xf32>
    %5 = vector.broadcast %4 : vector<1x256xf32> to vector<8x256xf32>
    %6 = arith.addf %3, %5 : vector<8x256xf32>
    %cst_5 = arith.constant 0.000000e+00 : f32
    %7 = vector.broadcast %cst_5 : f32 to vector<8x256xf32>
    %8 = arith.maximumf %6, %7 : vector<8x256xf32>
    %9 = arith.truncf %8 : vector<8x256xf32> to vector<8x256xbf16>
    %c0_6 = arith.constant 0 : index
    %c0_7 = arith.constant 0 : index
    %10 = vector.load %arg5[%c0_6, %c0_7] : memref<256x256xbf16, #tpu.memory_space<vmem>>, vector<256x256xbf16>
    %cst_8 = arith.constant dense<0.000000e+00> : vector<8x256xf32>
    %11 = tpu.matmul %9, %10, %cst_8 {dimension_numbers = #tpu.dot_dimension_numbers<[1], [0], [0], [1], [0, 0, 1, 1], [], []>} : vector<8x256xbf16>, vector<256x256xbf16>, vector<8x256xf32> -> vector<8x256xf32>
    %c0_9 = arith.constant 0 : index
    %c0_10 = arith.constant 0 : index
    %12 = vector.load %arg6[%c0_9, %c0_10] : memref<1x256xf32, #tpu.memory_space<vmem>>, vector<1x256xf32>
    %13 = vector.broadcast %12 : vector<1x256xf32> to vector<8x256xf32>
    %14 = arith.addf %11, %13 : vector<8x256xf32>
    %c0_11 = arith.constant 0 : index
    %c0_12 = arith.constant 0 : index
    %15 = vector.load %arg12[%c0_11, %c0_12] : memref<8x256xf32, #tpu.memory_space<vmem>>, vector<8x256xf32>
    tpu.vector_store %arg12[%c0_11, %c0_12], %14 {strides = array<i32>} : memref<8x256xf32, #tpu.memory_space<vmem>>, vector<8x256xf32>,
    %16 = vector.extract_strided_slice %14 {offsets = [0, 0], sizes = [8, 128], strides = [1, 1]} : vector<8x256xf32> to vector<8x128xf32>
    %17 = vector.extract_strided_slice %14 {offsets = [0, 128], sizes = [8, 128], strides = [1, 1]} : vector<8x256xf32> to vector<8x128xf32>
    %cst_13 = arith.constant 5.000000e-01 : f32
    %18 = vector.broadcast %cst_13 : f32 to vector<8x128xf32>
    %19 = arith.mulf %18, %17 : vector<8x128xf32>
    %20 = math.exp %19 : vector<8x128xf32>
    %c0_14 = arith.constant 0 : index
    %c0_15 = arith.constant 0 : index
    %21 = vector.load %arg2[%c0_14, %c0_15] : memref<8x128xf32, #tpu.memory_space<vmem>>, vector<8x128xf32>
    %22 = arith.mulf %21, %20 : vector<8x128xf32>
    %23 = arith.addf %16, %22 : vector<8x128xf32>
    %24 = arith.truncf %23 : vector<8x128xf32> to vector<8x128xbf16>
    %c0_16 = arith.constant 0 : index
    %c0_17 = arith.constant 0 : index
    %25 = vector.load %arg7[%c0_16, %c0_17] : memref<128x256xbf16, #tpu.memory_space<vmem>>, vector<128x256xbf16>
    %cst_18 = arith.constant dense<0.000000e+00> : vector<8x256xf32>
    %26 = tpu.matmul %24, %25, %cst_18 {dimension_numbers = #tpu.dot_dimension_numbers<[1], [0], [0], [1], [0, 0, 1, 1], [], []>} : vector<8x128xbf16>, vector<128x256xbf16>, vector<8x256xf32> -> vector<8x256xf32>
    %c0_19 = arith.constant 0 : index
    %c0_20 = arith.constant 0 : index
    %27 = vector.load %arg8[%c0_19, %c0_20] : memref<1x256xf32, #tpu.memory_space<vmem>>, vector<1x256xf32>
    %28 = vector.broadcast %27 : vector<1x256xf32> to vector<8x256xf32>
    %29 = arith.addf %26, %28 : vector<8x256xf32>
    %cst_21 = arith.constant 0.000000e+00 : f32
    %30 = vector.broadcast %cst_21 : f32 to vector<8x256xf32>
    %31 = arith.maximumf %29, %30 : vector<8x256xf32>
    %32 = arith.truncf %31 : vector<8x256xf32> to vector<8x256xbf16>
    %c0_22 = arith.constant 0 : index
    %c0_23 = arith.constant 0 : index
    %33 = vector.load %arg9[%c0_22, %c0_23] : memref<256x896xbf16, #tpu.memory_space<vmem>>, vector<256x896xbf16>
    %cst_24 = arith.constant dense<0.000000e+00> : vector<8x896xf32>
    %34 = tpu.matmul %32, %33, %cst_24 {dimension_numbers = #tpu.dot_dimension_numbers<[1], [0], [0], [1], [0, 0, 1, 1], [], []>} : vector<8x256xbf16>, vector<256x896xbf16>, vector<8x896xf32> -> vector<8x896xf32>
    %c0_25 = arith.constant 0 : index
    %c0_26 = arith.constant 0 : index
    %35 = vector.load %arg10[%c0_25, %c0_26] : memref<1x896xf32, #tpu.memory_space<vmem>>, vector<1x896xf32>
    %36 = vector.broadcast %35 : vector<1x896xf32> to vector<8x896xf32>
    %37 = arith.addf %34, %36 : vector<8x896xf32>
    %38 = arith.negf %37 : vector<8x896xf32>
    %39 = math.exp %38 : vector<8x896xf32>
    %cst_27 = arith.constant 1.000000e+00 : f32
    %40 = vector.broadcast %cst_27 : f32 to vector<8x896xf32>
    %41 = arith.addf %40, %39 : vector<8x896xf32>
    %42 = arith.divf %40, %41 : vector<8x896xf32>
    %c0_28 = arith.constant 0 : index
    %c0_29 = arith.constant 0 : index
    %43 = vector.load %arg11[%c0_28, %c0_29] : memref<8x896xf32, #tpu.memory_space<vmem>>, vector<8x896xf32>
    tpu.vector_store %arg11[%c0_28, %c0_29], %42 {strides = array<i32>} : memref<8x896xf32, #tpu.memory_space<vmem>>, vector<8x896xf32>,
    return
  }
  func.func @transform_0(%arg0: i32) -> (i32, i32) {
    %c0_i32 = arith.constant 0 : i32
    %c0_i32_0 = arith.constant 0 : i32
    return %arg0, %c0_i32 : i32, i32
  }
  func.func @transform_1(%arg0: i32) -> (i32, i32) {
    %c0_i32 = arith.constant 0 : i32
    %c0_i32_0 = arith.constant 0 : i32
    return %arg0, %c0_i32 : i32, i32
  }
  func.func @transform_2(%arg0: i32) -> (i32, i32) {
    %c0_i32 = arith.constant 0 : i32
    %c0_i32_0 = arith.constant 0 : i32
    %c0_i32_1 = arith.constant 0 : i32
    return %c0_i32, %c0_i32_0 : i32, i32
  }
  func.func @transform_3(%arg0: i32) -> (i32, i32) {
    %c0_i32 = arith.constant 0 : i32
    %c0_i32_0 = arith.constant 0 : i32
    %c0_i32_1 = arith.constant 0 : i32
    return %c0_i32, %c0_i32_0 : i32, i32
  }
  func.func @transform_4(%arg0: i32) -> (i32, i32) {
    %c0_i32 = arith.constant 0 : i32
    %c0_i32_0 = arith.constant 0 : i32
    %c0_i32_1 = arith.constant 0 : i32
    return %c0_i32, %c0_i32_0 : i32, i32
  }
  func.func @transform_5(%arg0: i32) -> (i32, i32) {
    %c0_i32 = arith.constant 0 : i32
    %c0_i32_0 = arith.constant 0 : i32
    %c0_i32_1 = arith.constant 0 : i32
    return %c0_i32, %c0_i32_0 : i32, i32
  }
  func.func @transform_6(%arg0: i32) -> (i32, i32) {
    %c0_i32 = arith.constant 0 : i32
    %c0_i32_0 = arith.constant 0 : i32
    %c0_i32_1 = arith.constant 0 : i32
    return %c0_i32, %c0_i32_0 : i32, i32
  }
  func.func @transform_7(%arg0: i32) -> (i32, i32) {
    %c0_i32 = arith.constant 0 : i32
    %c0_i32_0 = arith.constant 0 : i32
    %c0_i32_1 = arith.constant 0 : i32
    return %c0_i32, %c0_i32_0 : i32, i32
  }
  func.func @transform_8(%arg0: i32) -> (i32, i32) {
    %c0_i32 = arith.constant 0 : i32
    %c0_i32_0 = arith.constant 0 : i32
    %c0_i32_1 = arith.constant 0 : i32
    return %c0_i32, %c0_i32_0 : i32, i32
  }
  func.func @transform_9(%arg0: i32) -> (i32, i32) {
    %c0_i32 = arith.constant 0 : i32
    %c0_i32_0 = arith.constant 0 : i32
    %c0_i32_1 = arith.constant 0 : i32
    return %c0_i32, %c0_i32_0 : i32, i32
  }
  func.func @transform_10(%arg0: i32) -> (i32, i32) {
    %c0_i32 = arith.constant 0 : i32
    %c0_i32_0 = arith.constant 0 : i32
    return %arg0, %c0_i32 : i32, i32
  }
  func.func @transform_11(%arg0: i32) -> (i32, i32) {
    %c0_i32 = arith.constant 0 : i32
    %c0_i32_0 = arith.constant 0 : i32
    return %arg0, %c0_i32 : i32, i32
  }
}

</mosaic_0001>

<llo_original>
// kernel: tpu_custom_call.1
$region0: #{tpu_custom_call.1}
  #allocation0 [shape = 'u32[]', space=smem, size = 0x4, offset = 0x4, fixed_abs, tag = 'smem constant byte address 0x4 - core index']
  #allocation1 [shape = 'u32[72,128]{1,0:T(1,128)}', space=vmem, size = 0x9000, scoped, tag = 'internal scratch']
  %s0 = inlined_call_operand.hbm [shape: f32[8,896], index: 0, kind: input, shape index: {}]
  %s1 = inlined_call_operand.hbm [shape: f32[8,128], index: 1, kind: input, shape index: {}]
  %s2 = inlined_call_operand.hbm [shape: bf16[896,256], index: 2, kind: input, shape index: {}]
  %s3 = inlined_call_operand.hbm [shape: f32[1,256], index: 3, kind: input, shape index: {}]
  %s4 = inlined_call_operand.hbm [shape: bf16[256,256], index: 4, kind: input, shape index: {}]
  %s5 = inlined_call_operand.hbm [shape: f32[1,256], index: 5, kind: input, shape index: {}]
  %s6 = inlined_call_operand.hbm [shape: bf16[128,256], index: 6, kind: input, shape index: {}]
  %s7 = inlined_call_operand.hbm [shape: f32[1,256], index: 7, kind: input, shape index: {}]
  %s8 = inlined_call_operand.hbm [shape: bf16[256,896], index: 8, kind: input, shape index: {}]
  %s9 = inlined_call_operand.vmem [shape: f32[1,896], index: 9, kind: input, shape index: {}]
  %s10 = inlined_call_operand.hbm [shape: f32[8,896], index: 10, kind: output, shape index: {0}]
  %s11 = inlined_call_operand.hbm [shape: f32[8,256], index: 11, kind: output, shape index: {1}]
  %12 = xla_tuple %s10, %s11
  %s13 = sld [smem:[#allocation0]]
  $region94: #{tpu_custom_call.1} parent=0
    _
  %s15 = ssub.s32 1, %s13
  %s16 = scalar_select 0, %s15, %s13
  $region1: #{tpu_custom_call.1} parent=0
    #allocation2 [shape = 'u8[28672]{0}', space=vmem, size = 0x7000, scoped, tag = 'input window, operand 0, single buffered']
    #allocation3 [shape = 's32[1]{0}', space=sflag, size = 0x4, scoped, tag = 'scoped memory for tpu_custom_call.1']
    #allocation4 [shape = 's32[1]{0}', space=sflag, size = 0x4, scoped, tag = 'scoped memory for tpu_custom_call.1']
    #allocation5 [shape = 'u8[4096]{0}', space=vmem, size = 0x1000, scoped, tag = 'input window, operand 1, single buffered']
    #allocation6 [shape = 's32[1]{0}', space=sflag, size = 0x4, scoped, tag = 'scoped memory for tpu_custom_call.1']
    #allocation7 [shape = 'u8[458752]{0}', space=vmem, size = 0x70000, scoped, tag = 'input window, operand 2, single buffered']
    #allocation8 [shape = 'u8[1024]{0}', space=vmem, size = 0x400, scoped, tag = 'input window, operand 3, single buffered']
    #allocation9 [shape = 's32[1]{0}', space=sflag, size = 0x4, scoped, tag = 'scoped memory for tpu_custom_call.1']
    #allocation10 [shape = 'u8[131072]{0}', space=vmem, size = 0x20000, scoped, tag = 'input window, operand 4, single buffered']
    #allocation11 [shape = 'u8[1024]{0}', space=vmem, size = 0x400, scoped, tag = 'input window, operand 5, single buffered']
    #allocation12 [shape = 's32[1]{0}', space=sflag, size = 0x4, scoped, tag = 'scoped memory for tpu_custom_call.1']
    #allocation13 [shape = 'u8[65536]{0}', space=vmem, size = 0x10000, scoped, tag = 'input window, operand 6, single buffered']
    #allocation14 [shape = 'u8[1024]{0}', space=vmem, size = 0x400, scoped, tag = 'input window, operand 7, single buffered']
    #allocation15 [shape = 's32[1]{0}', space=sflag, size = 0x4, scoped, tag = 'scoped memory for tpu_custom_call.1']
    #allocation16 [shape = 'u8[458752]{0}', space=vmem, size = 0x70000, scoped, tag = 'input window, operand 8, single buffered']
    #allocation17 [shape = 'u8[28672]{0}', space=vmem, size = 0x7000, scoped, tag = 'output window, operand 0, single buffered']
    #allocation18 [shape = 'u8[8192]{0}', space=vmem, size = 0x2000, scoped, tag = 'output window, operand 1, single buffered']
    #allocation19 [shape = 's32[1]{0}', space=sflag, size = 0x4, scoped, tag = 'scoped memory for tpu_custom_call.1']
    %17 = vsyncpa [#allocation3], 0
    %18 = vsyncpa [#allocation6], 0
    %19 = vsyncpa [#allocation9], 0
    %20 = vsyncpa [#allocation12], 0
    %21 = vsyncpa [#allocation15], 0
    %22 = vsyncpa [#allocation4], 0
    %23 = vsyncpa [#allocation19], 0
    // Predicated region
    $region2: #{tpu_custom_call.1} parent=1 // pred_check
      _
    $region3: #{tpu_custom_call.1} parent=1 // pred_check_branch
      %25 = sbr.rel (0) target = $region5
    $region4: #{tpu_custom_call.1} parent=1 // pred_region
      %27 = vsyncadd [#allocation3], 0
      %s29 = sshll.u32 %s0, 4
      %s30 = int_to_ptr.hbm [resolvable:$true] %s29
      %s31 = sshll.u32 [#allocation2], 4
      %s32 = int_to_ptr.vmem [resolvable:$true] %s31
      %34 = dma.hbm_to_vmem [thread:$0]  %s30, 896, %s32, [#allocation3]
    $region5: #{tpu_custom_call.1} parent=1 // pred_fallthru
      _
    // Predicated region
    $region6: #{tpu_custom_call.1} parent=1 // pred_check
      _
    $region7: #{tpu_custom_call.1} parent=1 // pred_check_branch
      %36 = sbr.rel (0) target = $region9
    $region8: #{tpu_custom_call.1} parent=1 // pred_region
      %38 = vsyncadd [#allocation6], 0
      %s40 = sshll.u32 %s1, 4
      %s41 = int_to_ptr.hbm [resolvable:$true] %s40
      %s42 = sshll.u32 [#allocation5], 4
      %s43 = int_to_ptr.vmem [resolvable:$true] %s42
      %45 = dma.hbm_to_vmem [thread:$0]  %s41, 128, %s43, [#allocation6]
    $region9: #{tpu_custom_call.1} parent=1 // pred_fallthru
      _
    // Predicated region
    $region10: #{tpu_custom_call.1} parent=1 // pred_check
      _
    $region11: #{tpu_custom_call.1} parent=1 // pred_check_branch
      %47 = sbr.rel (0) target = $region13
    $region12: #{tpu_custom_call.1} parent=1 // pred_region
      %49 = vsyncadd [#allocation6], 0
      %s50 = sshll.u32 %s2, 4
      %s51 = int_to_ptr.hbm [resolvable:$true] %s50
      %s52 = sshll.u32 [#allocation7], 4
      %s53 = int_to_ptr.vmem [resolvable:$true] %s52
      %58 = dma.hbm_to_vmem [thread:$0]  %s51, 14336, %s53, [#allocation6], 128, 128, 8
    $region13: #{tpu_custom_call.1} parent=1 // pred_fallthru
      _
    // Predicated region
    $region14: #{tpu_custom_call.1} parent=1 // pred_check
      _
    $region15: #{tpu_custom_call.1} parent=1 // pred_check_branch
      %60 = sbr.rel (0) target = $region17
    $region16: #{tpu_custom_call.1} parent=1 // pred_region
      %62 = vsyncadd [#allocation9], 0
      %s64 = sshll.u32 %s3, 4
      %s65 = int_to_ptr.hbm [resolvable:$true] %s64
      %s66 = sshll.u32 [#allocation8], 4
      %s67 = int_to_ptr.vmem [resolvable:$true] %s66
      %69 = dma.hbm_to_vmem [thread:$0]  %s65, 32, %s67, [#allocation9]
    $region17: #{tpu_custom_call.1} parent=1 // pred_fallthru
      _
    // Predicated region
    $region18: #{tpu_custom_call.1} parent=1 // pred_check
      _
    $region19: #{tpu_custom_call.1} parent=1 // pred_check_branch
      %71 = sbr.rel (0) target = $region21
    $region20: #{tpu_custom_call.1} parent=1 // pred_region
      %73 = vsyncadd [#allocation9], 0
      %s74 = sshll.u32 %s4, 4
      %s75 = int_to_ptr.hbm [resolvable:$true] %s74
      %s76 = sshll.u32 [#allocation10], 4
      %s77 = int_to_ptr.vmem [resolvable:$true] %s76
      %82 = dma.hbm_to_vmem [thread:$0]  %s75, 4096, %s77, [#allocation9], 128, 128, 8
    $region21: #{tpu_custom_call.1} parent=1 // pred_fallthru
      _
    // Predicated region
    $region22: #{tpu_custom_call.1} parent=1 // pred_check
      _
    $region23: #{tpu_custom_call.1} parent=1 // pred_check_branch
      %84 = sbr.rel (0) target = $region25
    $region24: #{tpu_custom_call.1} parent=1 // pred_region
      %86 = vsyncadd [#allocation12], 0
      %s88 = sshll.u32 %s5, 4
      %s89 = int_to_ptr.hbm [resolvable:$true] %s88
      %s90 = sshll.u32 [#allocation11], 4
      %s91 = int_to_ptr.vmem [resolvable:$true] %s90
      %93 = dma.hbm_to_vmem [thread:$0]  %s89, 32, %s91, [#allocation12]
    $region25: #{tpu_custom_call.1} parent=1 // pred_fallthru
      _
    // Predicated region
    $region26: #{tpu_custom_call.1} parent=1 // pred_check
      _
    $region27: #{tpu_custom_call.1} parent=1 // pred_check_branch
      %95 = sbr.rel (0) target = $region29
    $region28: #{tpu_custom_call.1} parent=1 // pred_region
      %97 = vsyncadd [#allocation12], 0
      %s98 = sshll.u32 %s6, 4
      %s99 = int_to_ptr.hbm [resolvable:$true] %s98
      %s100 = sshll.u32 [#allocation13], 4
      %s101 = int_to_ptr.vmem [resolvable:$true] %s100
      %106 = dma.hbm_to_vmem [thread:$0]  %s99, 2048, %s101, [#allocation12], 128, 128, 8
    $region29: #{tpu_custom_call.1} parent=1 // pred_fallthru
      _
    // Predicated region
    $region30: #{tpu_custom_call.1} parent=1 // pred_check
      _
    $region31: #{tpu_custom_call.1} parent=1 // pred_check_branch
      %108 = sbr.rel (0) target = $region33
    $region32: #{tpu_custom_call.1} parent=1 // pred_region
      %110 = vsyncadd [#allocation15], 0
      %s112 = sshll.u32 %s7, 4
      %s113 = int_to_ptr.hbm [resolvable:$true] %s112
      %s114 = sshll.u32 [#allocation14], 4
      %s115 = int_to_ptr.vmem [resolvable:$true] %s114
      %117 = dma.hbm_to_vmem [thread:$0]  %s113, 32, %s115, [#allocation15]
    $region33: #{tpu_custom_call.1} parent=1 // pred_fallthru
      _
    // Predicated region
    $region34: #{tpu_custom_call.1} parent=1 // pred_check
      _
    $region35: #{tpu_custom_call.1} parent=1 // pred_check_branch
      %119 = sbr.rel (0) target = $region37
    $region36: #{tpu_custom_call.1} parent=1 // pred_region
      %121 = vsyncadd [#allocation15], 0
      %s122 = sshll.u32 %s8, 4
      %s123 = int_to_ptr.hbm [resolvable:$true] %s122
      %s124 = sshll.u32 [#allocation16], 4
      %s125 = int_to_ptr.vmem [resolvable:$true] %s124
      %130 = dma.hbm_to_vmem [thread:$0]  %s123, 14336, %s125, [#allocation15], 448, 448, 28
    $region37: #{tpu_custom_call.1} parent=1 // pred_fallthru
      _
    // Predicated region
    $region38: #{tpu_custom_call.1} parent=1 // pred_check
      _
    $region39: #{tpu_custom_call.1} parent=1 // pred_check_branch
      %132 = sbr.rel (0) target = $region41
    $region40: #{tpu_custom_call.1} parent=1 // pred_region
      _
    $region41: #{tpu_custom_call.1} parent=1 // pred_fallthru
      _
    // Predicated region
    $region42: #{tpu_custom_call.1} parent=1 // pred_check
      _
    $region43: #{tpu_custom_call.1} parent=1 // pred_check_branch
      %134 = sbr.rel (0) target = $region45
    $region44: #{tpu_custom_call.1} parent=1 // pred_region
      %136 = dma.done [#allocation3], 896
    $region45: #{tpu_custom_call.1} parent=1 // pred_fallthru
      _
    // Predicated region
    $region46: #{tpu_custom_call.1} parent=1 // pred_check
      _
    $region47: #{tpu_custom_call.1} parent=1 // pred_check_branch
      %138 = sbr.rel (0) target = $region49
    $region48: #{tpu_custom_call.1} parent=1 // pred_region
      %140 = dma.done [#allocation6], 128
    $region49: #{tpu_custom_call.1} parent=1 // pred_fallthru
      _
    // Predicated region
    $region50: #{tpu_custom_call.1} parent=1 // pred_check
      _
    $region51: #{tpu_custom_call.1} parent=1 // pred_check_branch
      %142 = sbr.rel (0) target = $region53
    $region52: #{tpu_custom_call.1} parent=1 // pred_region
      %144 = dma.done [#allocation6], 14336
    $region53: #{tpu_custom_call.1} parent=1 // pred_fallthru
      _
    // Predicated region
    $region54: #{tpu_custom_call.1} parent=1 // pred_check
      _
    $region55: #{tpu_custom_call.1} parent=1 // pred_check_branch
      %146 = sbr.rel (0) target = $region57
    $region56: #{tpu_custom_call.1} parent=1 // pred_region
      %148 = dma.done [#allocation9], 32
    $region57: #{tpu_custom_call.1} parent=1 // pred_fallthru
      _
    // Predicated region
    $region58: #{tpu_custom_call.1} parent=1 // pred_check
      _
    $region59: #{tpu_custom_call.1} parent=1 // pred_check_branch
      %150 = sbr.rel (0) target = $region61
    $region60: #{tpu_custom_call.1} parent=1 // pred_region
      %152 = dma.done [#allocation9], 4096
    $region61: #{tpu_custom_call.1} parent=1 // pred_fallthru
      _
    // Predicated region
    $region62: #{tpu_custom_call.1} parent=1 // pred_check
      _
    $region63: #{tpu_custom_call.1} parent=1 // pred_check_branch
      %154 = sbr.rel (0) target = $region65
    $region64: #{tpu_custom_call.1} parent=1 // pred_region
      %156 = dma.done [#allocation12], 32
    $region65: #{tpu_custom_call.1} parent=1 // pred_fallthru
      _
    // Predicated region
    $region66: #{tpu_custom_call.1} parent=1 // pred_check
      _
    $region67: #{tpu_custom_call.1} parent=1 // pred_check_branch
      %158 = sbr.rel (0) target = $region69
    $region68: #{tpu_custom_call.1} parent=1 // pred_region
      %160 = dma.done [#allocation12], 2048
    $region69: #{tpu_custom_call.1} parent=1 // pred_fallthru
      _
    // Predicated region
    $region70: #{tpu_custom_call.1} parent=1 // pred_check
      _
    $region71: #{tpu_custom_call.1} parent=1 // pred_check_branch
      %162 = sbr.rel (0) target = $region73
    $region72: #{tpu_custom_call.1} parent=1 // pred_region
      %164 = dma.done [#allocation15], 32
    $region73: #{tpu_custom_call.1} parent=1 // pred_fallthru
      _
    // Predicated region
    $region74: #{tpu_custom_call.1} parent=1 // pred_check
      _
    $region75: #{tpu_custom_call.1} parent=1 // pred_check_branch
      %166 = sbr.rel (0) target = $region77
    $region76: #{tpu_custom_call.1} parent=1 // pred_region
      %168 = dma.done [#allocation15], 14336
    $region77: #{tpu_custom_call.1} parent=1 // pred_fallthru
      _
    %v169 = vld [vmem:[#allocation2] sm:$0xff]
    %v170 = vld [vmem:[#allocation2 + $0x8] sm:$0xff]
    %v171 = vld [vmem:[#allocation2 + $0x10] sm:$0xff]
    %v172 = vld [vmem:[#allocation2 + $0x18] sm:$0xff]
    %v173 = vld [vmem:[#allocation2 + $0x20] sm:$0xff]
    %v174 = vld [vmem:[#allocation2 + $0x28] sm:$0xff]
    %v175 = vld [vmem:[#allocation2 + $0x30] sm:$0xff]
    %v176 = vpack.c.bf16 %v169, %v169
    %v177 = vpack.c.bf16 %v170, %v170
    %v178 = vpack.c.bf16 %v171, %v171
    %v179 = vpack.c.bf16 %v172, %v172
    %v180 = vpack.c.bf16 %v173, %v173
    %v181 = vpack.c.bf16 %v174, %v174
    %v182 = vpack.c.bf16 %v175, %v175
    %v183 = vld [vmem:[#allocation7] sm:$0xff]
    %v184 = vld [vmem:[#allocation7 + $0x8] sm:$0xff]
    %v185 = vld [vmem:[#allocation7 + $0x10] sm:$0xff]
    %v186 = vld [vmem:[#allocation7 + $0x18] sm:$0xff]
    %v187 = vld [vmem:[#allocation7 + $0x20] sm:$0xff]
    %v188 = vld [vmem:[#allocation7 + $0x28] sm:$0xff]
    %v189 = vld [vmem:[#allocation7 + $0x30] sm:$0xff]
    %v190 = vld [vmem:[#allocation7 + $0x38] sm:$0xff]
    %v191 = vld [vmem:[#allocation7 + $0x40] sm:$0xff]
    %v192 = vld [vmem:[#allocation7 + $0x48] sm:$0xff]
    %v193 = vld [vmem:[#allocation7 + $0x50] sm:$0xff]
    %v194 = vld [vmem:[#allocation7 + $0x58] sm:$0xff]
    %v195 = vld [vmem:[#allocation7 + $0x60] sm:$0xff]
    %v196 = vld [vmem:[#allocation7 + $0x68] sm:$0xff]
    %v197 = vld [vmem:[#allocation7 + $0x70] sm:$0xff]
    %v198 = vld [vmem:[#allocation7 + $0x78] sm:$0xff]
    %v199 = vld [vmem:[#allocation7 + $0x80] sm:$0xff]
    %v200 = vld [vmem:[#allocation7 + $0x88] sm:$0xff]
    %v201 = vld [vmem:[#allocation7 + $0x90] sm:$0xff]
    %v202 = vld [vmem:[#allocation7 + $0x98] sm:$0xff]
    %v203 = vld [vmem:[#allocation7 + $0xa0] sm:$0xff]
    %v204 = vld [vmem:[#allocation7 + $0xa8] sm:$0xff]
    %v205 = vld [vmem:[#allocation7 + $0xb0] sm:$0xff]
    %v206 = vld [vmem:[#allocation7 + $0xb8] sm:$0xff]
    %v207 = vld [vmem:[#allocation7 + $0xc0] sm:$0xff]
    %v208 = vld [vmem:[#allocation7 + $0xc8] sm:$0xff]
    %v209 = vld [vmem:[#allocation7 + $0xd0] sm:$0xff]
    %v210 = vld [vmem:[#allocation7 + $0xd8] sm:$0xff]
    %v211 = vld [vmem:[#allocation7 + $0xe0] sm:$0xff]
    %v212 = vld [vmem:[#allocation7 + $0xe8] sm:$0xff]
    %v213 = vld [vmem:[#allocation7 + $0xf0] sm:$0xff]
    %v214 = vld [vmem:[#allocation7 + $0xf8] sm:$0xff]
    %v215 = vld [vmem:[#allocation7 + $0x100] sm:$0xff]
    %v216 = vld [vmem:[#allocation7 + $0x108] sm:$0xff]
    %v217 = vld [vmem:[#allocation7 + $0x110] sm:$0xff]
    %v218 = vld [vmem:[#allocation7 + $0x118] sm:$0xff]
    %v219 = vld [vmem:[#allocation7 + $0x120] sm:$0xff]
    %v220 = vld [vmem:[#allocation7 + $0x128] sm:$0xff]
    %v221 = vld [vmem:[#allocation7 + $0x130] sm:$0xff]
    %v222 = vld [vmem:[#allocation7 + $0x138] sm:$0xff]
    %v223 = vld [vmem:[#allocation7 + $0x140] sm:$0xff]
    %v224 = vld [vmem:[#allocation7 + $0x148] sm:$0xff]
    %v225 = vld [vmem:[#allocation7 + $0x150] sm:$0xff]
    %v226 = vld [vmem:[#allocation7 + $0x158] sm:$0xff]
    %v227 = vld [vmem:[#allocation7 + $0x160] sm:$0xff]
    %v228 = vld [vmem:[#allocation7 + $0x168] sm:$0xff]
    %v229 = vld [vmem:[#allocation7 + $0x170] sm:$0xff]
    %v230 = vld [vmem:[#allocation7 + $0x178] sm:$0xff]
    %v231 = vld [vmem:[#allocation7 + $0x180] sm:$0xff]
    %v232 = vld [vmem:[#allocation7 + $0x188] sm:$0xff]
    %v233 = vld [vmem:[#allocation7 + $0x190] sm:$0xff]
    %v234 = vld [vmem:[#allocation7 + $0x198] sm:$0xff]
    %v235 = vld [vmem:[#allocation7 + $0x1a0] sm:$0xff]
    %v236 = vld [vmem:[#allocation7 + $0x1a8] sm:$0xff]
    %v237 = vld [vmem:[#allocation7 + $0x1b0] sm:$0xff]
    %v238 = vld [vmem:[#allocation7 + $0x1b8] sm:$0xff]
    %v239 = vld [vmem:[#allocation7 + $0x1c0] sm:$0xff]
    %v240 = vld [vmem:[#allocation7 + $0x1c8] sm:$0xff]
    %v241 = vld [vmem:[#allocation7 + $0x1d0] sm:$0xff]
    %v242 = vld [vmem:[#allocation7 + $0x1d8] sm:$0xff]
    %v243 = vld [vmem:[#allocation7 + $0x1e0] sm:$0xff]
    %v244 = vld [vmem:[#allocation7 + $0x1e8] sm:$0xff]
    %v245 = vld [vmem:[#allocation7 + $0x1f0] sm:$0xff]
    %v246 = vld [vmem:[#allocation7 + $0x1f8] sm:$0xff]
    %v247 = vld [vmem:[#allocation7 + $0x200] sm:$0xff]
    %v248 = vld [vmem:[#allocation7 + $0x208] sm:$0xff]
    %v249 = vld [vmem:[#allocation7 + $0x210] sm:$0xff]
    %v250 = vld [vmem:[#allocation7 + $0x218] sm:$0xff]
    %v251 = vld [vmem:[#allocation7 + $0x220] sm:$0xff]
    %v252 = vld [vmem:[#allocation7 + $0x228] sm:$0xff]
    %v253 = vld [vmem:[#allocation7 + $0x230] sm:$0xff]
    %v254 = vld [vmem:[#allocation7 + $0x238] sm:$0xff]
    %v255 = vld [vmem:[#allocation7 + $0x240] sm:$0xff]
    %v256 = vld [vmem:[#allocation7 + $0x248] sm:$0xff]
    %v257 = vld [vmem:[#allocation7 + $0x250] sm:$0xff]
    %v258 = vld [vmem:[#allocation7 + $0x258] sm:$0xff]
    %v259 = vld [vmem:[#allocation7 + $0x260] sm:$0xff]
    %v260 = vld [vmem:[#allocation7 + $0x268] sm:$0xff]
    %v261 = vld [vmem:[#allocation7 + $0x270] sm:$0xff]
    %v262 = vld [vmem:[#allocation7 + $0x278] sm:$0xff]
    %v263 = vld [vmem:[#allocation7 + $0x280] sm:$0xff]
    %v264 = vld [vmem:[#allocation7 + $0x288] sm:$0xff]
    %v265 = vld [vmem:[#allocation7 + $0x290] sm:$0xff]
    %v266 = vld [vmem:[#allocation7 + $0x298] sm:$0xff]
    %v267 = vld [vmem:[#allocation7 + $0x2a0] sm:$0xff]
    %v268 = vld [vmem:[#allocation7 + $0x2a8] sm:$0xff]
    %v269 = vld [vmem:[#allocation7 + $0x2b0] sm:$0xff]
    %v270 = vld [vmem:[#allocation7 + $0x2b8] sm:$0xff]
    %v271 = vld [vmem:[#allocation7 + $0x2c0] sm:$0xff]
    %v272 = vld [vmem:[#allocation7 + $0x2c8] sm:$0xff]
    %v273 = vld [vmem:[#allocation7 + $0x2d0] sm:$0xff]
    %v274 = vld [vmem:[#allocation7 + $0x2d8] sm:$0xff]
    %v275 = vld [vmem:[#allocation7 + $0x2e0] sm:$0xff]
    %v276 = vld [vmem:[#allocation7 + $0x2e8] sm:$0xff]
    %v277 = vld [vmem:[#allocation7 + $0x2f0] sm:$0xff]
    %v278 = vld [vmem:[#allocation7 + $0x2f8] sm:$0xff]
    %v279 = vld [vmem:[#allocation7 + $0x300] sm:$0xff]
    %v280 = vld [vmem:[#allocation7 + $0x308] sm:$0xff]
    %v281 = vld [vmem:[#allocation7 + $0x310] sm:$0xff]
    %v282 = vld [vmem:[#allocation7 + $0x318] sm:$0xff]
    %v283 = vld [vmem:[#allocation7 + $0x320] sm:$0xff]
    %v284 = vld [vmem:[#allocation7 + $0x328] sm:$0xff]
    %v285 = vld [vmem:[#allocation7 + $0x330] sm:$0xff]
    %v286 = vld [vmem:[#allocation7 + $0x338] sm:$0xff]
    %v287 = vld [vmem:[#allocation7 + $0x340] sm:$0xff]
    %v288 = vld [vmem:[#allocation7 + $0x348] sm:$0xff]
    %v289 = vld [vmem:[#allocation7 + $0x350] sm:$0xff]
    %v290 = vld [vmem:[#allocation7 + $0x358] sm:$0xff]
    %v291 = vld [vmem:[#allocation7 + $0x360] sm:$0xff]
    %v292 = vld [vmem:[#allocation7 + $0x368] sm:$0xff]
    %v293 = vld [vmem:[#allocation7 + $0x370] sm:$0xff]
    %v294 = vld [vmem:[#allocation7 + $0x378] sm:$0xff]
    %v295 = vld [vmem:[#allocation8] sm:$0x3]
    %v297 = vperm.slane %v295, 0
    %v298 = vperm.slane %v295, 1
    %v413 = vunpack.c.l.b16 %v183
    %v414 = vunpack.c.h.b16 %v183
    %v415 = vunpack.c.l.b16 %v184
    %v416 = vunpack.c.h.b16 %v184
    %v417 = vunpack.c.l.b16 %v185
    %v418 = vunpack.c.h.b16 %v185
    %v419 = vunpack.c.l.b16 %v186
    %v420 = vunpack.c.h.b16 %v186
    %v421 = vunpack.c.l.b16 %v187
    %v422 = vunpack.c.h.b16 %v187
    %v423 = vunpack.c.l.b16 %v188
    %v424 = vunpack.c.h.b16 %v188
    %v425 = vunpack.c.l.b16 %v189
    %v426 = vunpack.c.h.b16 %v189
    %v427 = vunpack.c.l.b16 %v190
    %v428 = vunpack.c.h.b16 %v190
    %v429 = vunpack.c.l.b16 %v191
    %v430 = vunpack.c.h.b16 %v191
    %v431 = vunpack.c.l.b16 %v192
    %v432 = vunpack.c.h.b16 %v192
    %v433 = vunpack.c.l.b16 %v193
    %v434 = vunpack.c.h.b16 %v193
    %v435 = vunpack.c.l.b16 %v194
    %v436 = vunpack.c.h.b16 %v194
    %v437 = vunpack.c.l.b16 %v195
    %v438 = vunpack.c.h.b16 %v195
    %v439 = vunpack.c.l.b16 %v196
    %v440 = vunpack.c.h.b16 %v196
    %v441 = vunpack.c.l.b16 %v197
    %v442 = vunpack.c.h.b16 %v197
    %v443 = vunpack.c.l.b16 %v198
    %v444 = vunpack.c.h.b16 %v198
    %v445 = vunpack.c.l.b16 %v199
    %v446 = vunpack.c.h.b16 %v199
    %v447 = vunpack.c.l.b16 %v200
    %v448 = vunpack.c.h.b16 %v200
    %v449 = vunpack.c.l.b16 %v201
    %v450 = vunpack.c.h.b16 %v201
    %v451 = vunpack.c.l.b16 %v202
    %v452 = vunpack.c.h.b16 %v202
    %v453 = vunpack.c.l.b16 %v203
    %v454 = vunpack.c.h.b16 %v203
    %v455 = vunpack.c.l.b16 %v204
    %v456 = vunpack.c.h.b16 %v204
    %v457 = vunpack.c.l.b16 %v205
    %v458 = vunpack.c.h.b16 %v205
    %v459 = vunpack.c.l.b16 %v206
    %v460 = vunpack.c.h.b16 %v206
    %v461 = vunpack.c.l.b16 %v207
    %v462 = vunpack.c.h.b16 %v207
    %v463 = vunpack.c.l.b16 %v208
    %v464 = vunpack.c.h.b16 %v208
    %v465 = vunpack.c.l.b16 %v209
    %v466 = vunpack.c.h.b16 %v209
    %v467 = vunpack.c.l.b16 %v210
    %v468 = vunpack.c.h.b16 %v210
    %v469 = vunpack.c.l.b16 %v211
    %v470 = vunpack.c.h.b16 %v211
    %v471 = vunpack.c.l.b16 %v212
    %v472 = vunpack.c.h.b16 %v212
    %v473 = vunpack.c.l.b16 %v213
    %v474 = vunpack.c.h.b16 %v213
    %v475 = vunpack.c.l.b16 %v214
    %v476 = vunpack.c.h.b16 %v214
    %v477 = vunpack.c.l.b16 %v215
    %v478 = vunpack.c.h.b16 %v215
    %v479 = vunpack.c.l.b16 %v216
    %v480 = vunpack.c.h.b16 %v216
    %v481 = vunpack.c.l.b16 %v217
    %v482 = vunpack.c.h.b16 %v217
    %v483 = vunpack.c.l.b16 %v218
    %v484 = vunpack.c.h.b16 %v218
    %v485 = vunpack.c.l.b16 %v219
    %v486 = vunpack.c.h.b16 %v219
    %v487 = vunpack.c.l.b16 %v220
    %v488 = vunpack.c.h.b16 %v220
    %v489 = vunpack.c.l.b16 %v221
    %v490 = vunpack.c.h.b16 %v221
    %v491 = vunpack.c.l.b16 %v222
    %v492 = vunpack.c.h.b16 %v222
    %v493 = vunpack.c.l.b16 %v223
    %v494 = vunpack.c.h.b16 %v223
    %v495 = vunpack.c.l.b16 %v224
    %v496 = vunpack.c.h.b16 %v224
    %v497 = vunpack.c.l.b16 %v225
    %v498 = vunpack.c.h.b16 %v225
    %v499 = vunpack.c.l.b16 %v226
    %v500 = vunpack.c.h.b16 %v226
    %v501 = vunpack.c.l.b16 %v227
    %v502 = vunpack.c.h.b16 %v227
    %v503 = vunpack.c.l.b16 %v228
    %v504 = vunpack.c.h.b16 %v228
    %v505 = vunpack.c.l.b16 %v229
    %v506 = vunpack.c.h.b16 %v229
    %v507 = vunpack.c.l.b16 %v230
    %v508 = vunpack.c.h.b16 %v230
    %v509 = vunpack.c.l.b16 %v231
    %v510 = vunpack.c.h.b16 %v231
    %v511 = vunpack.c.l.b16 %v232
    %v512 = vunpack.c.h.b16 %v232
    %v513 = vunpack.c.l.b16 %v233
    %v514 = vunpack.c.h.b16 %v233
    %v515 = vunpack.c.l.b16 %v234
    %v516 = vunpack.c.h.b16 %v234
    %v517 = vunpack.c.l.b16 %v235
    %v518 = vunpack.c.h.b16 %v235
    %v519 = vunpack.c.l.b16 %v236
    %v520 = vunpack.c.h.b16 %v236
    %v521 = vunpack.c.l.b16 %v237
    %v522 = vunpack.c.h.b16 %v237
    %v523 = vunpack.c.l.b16 %v238
    %v524 = vunpack.c.h.b16 %v238
    %v525 = vunpack.c.l.b16 %v239
    %v526 = vunpack.c.h.b16 %v239
    %v527 = vunpack.c.l.b16 %v240
    %v528 = vunpack.c.h.b16 %v240
    %v529 = vunpack.c.l.b16 %v241
    %v530 = vunpack.c.h.b16 %v241
    %v531 = vunpack.c.l.b16 %v242
    %v532 = vunpack.c.h.b16 %v242
    %v533 = vunpack.c.l.b16 %v243
    %v534 = vunpack.c.h.b16 %v243
    %v535 = vunpack.c.l.b16 %v244
    %v536 = vunpack.c.h.b16 %v244
    %v537 = vunpack.c.l.b16 %v245
    %v538 = vunpack.c.h.b16 %v245
    %v539 = vunpack.c.l.b16 %v246
    %v540 = vunpack.c.h.b16 %v246
    %v541 = vunpack.c.l.b16 %v247
    %v542 = vunpack.c.h.b16 %v247
    %v543 = vunpack.c.l.b16 %v248
    %v544 = vunpack.c.h.b16 %v248
    %v545 = vunpack.c.l.b16 %v249
    %v546 = vunpack.c.h.b16 %v249
    %v547 = vunpack.c.l.b16 %v250
    %v548 = vunpack.c.h.b16 %v250
    %v549 = vunpack.c.l.b16 %v251
    %v550 = vunpack.c.h.b16 %v251
    %v551 = vunpack.c.l.b16 %v252
    %v552 = vunpack.c.h.b16 %v252
    %v553 = vunpack.c.l.b16 %v253
    %v554 = vunpack.c.h.b16 %v253
    %v555 = vunpack.c.l.b16 %v254
    %v556 = vunpack.c.h.b16 %v254
    %v557 = vunpack.c.l.b16 %v255
    %v558 = vunpack.c.h.b16 %v255
    %v559 = vunpack.c.l.b16 %v256
    %v560 = vunpack.c.h.b16 %v256
    %v561 = vunpack.c.l.b16 %v257
    %v562 = vunpack.c.h.b16 %v257
    %v563 = vunpack.c.l.b16 %v258
    %v564 = vunpack.c.h.b16 %v258
    %v565 = vunpack.c.l.b16 %v259
    %v566 = vunpack.c.h.b16 %v259
    %v567 = vunpack.c.l.b16 %v260
    %v568 = vunpack.c.h.b16 %v260
    %v569 = vunpack.c.l.b16 %v261
    %v570 = vunpack.c.h.b16 %v261
    %v571 = vunpack.c.l.b16 %v262
    %v572 = vunpack.c.h.b16 %v262
    %v573 = vunpack.c.l.b16 %v263
    %v574 = vunpack.c.h.b16 %v263
    %v575 = vunpack.c.l.b16 %v264
    %v576 = vunpack.c.h.b16 %v264
    %v577 = vunpack.c.l.b16 %v265
    %v578 = vunpack.c.h.b16 %v265
    %v579 = vunpack.c.l.b16 %v266
    %v580 = vunpack.c.h.b16 %v266
    %v581 = vunpack.c.l.b16 %v267
    %v582 = vunpack.c.h.b16 %v267
    %v583 = vunpack.c.l.b16 %v268
    %v584 = vunpack.c.h.b16 %v268
    %v585 = vunpack.c.l.b16 %v269
    %v586 = vunpack.c.h.b16 %v269
    %v587 = vunpack.c.l.b16 %v270
    %v588 = vunpack.c.h.b16 %v270
    %v589 = vunpack.c.l.b16 %v271
    %v590 = vunpack.c.h.b16 %v271
    %v591 = vunpack.c.l.b16 %v272
    %v592 = vunpack.c.h.b16 %v272
    %v593 = vunpack.c.l.b16 %v273
    %v594 = vunpack.c.h.b16 %v273
    %v595 = vunpack.c.l.b16 %v274
    %v596 = vunpack.c.h.b16 %v274
    %v597 = vunpack.c.l.b16 %v275
    %v598 = vunpack.c.h.b16 %v275
    %v599 = vunpack.c.l.b16 %v276
    %v600 = vunpack.c.h.b16 %v276
    %v601 = vunpack.c.l.b16 %v277
    %v602 = vunpack.c.h.b16 %v277
    %v603 = vunpack.c.l.b16 %v278
    %v604 = vunpack.c.h.b16 %v278
    %v605 = vunpack.c.l.b16 %v279
    %v606 = vunpack.c.h.b16 %v279
    %v607 = vunpack.c.l.b16 %v280
    %v608 = vunpack.c.h.b16 %v280
    %v609 = vunpack.c.l.b16 %v281
    %v610 = vunpack.c.h.b16 %v281
    %v611 = vunpack.c.l.b16 %v282
    %v612 = vunpack.c.h.b16 %v282
    %v613 = vunpack.c.l.b16 %v283
    %v614 = vunpack.c.h.b16 %v283
    %v615 = vunpack.c.l.b16 %v284
    %v616 = vunpack.c.h.b16 %v284
    %v617 = vunpack.c.l.b16 %v285
    %v618 = vunpack.c.h.b16 %v285
    %v619 = vunpack.c.l.b16 %v286
    %v620 = vunpack.c.h.b16 %v286
    %v621 = vunpack.c.l.b16 %v287
    %v622 = vunpack.c.h.b16 %v287
    %v623 = vunpack.c.l.b16 %v288
    %v624 = vunpack.c.h.b16 %v288
    %v625 = vunpack.c.l.b16 %v289
    %v626 = vunpack.c.h.b16 %v289
    %v627 = vunpack.c.l.b16 %v290
    %v628 = vunpack.c.h.b16 %v290
    %v629 = vunpack.c.l.b16 %v291
    %v630 = vunpack.c.h.b16 %v291
    %v631 = vunpack.c.l.b16 %v292
    %v632 = vunpack.c.h.b16 %v292
    %v633 = vunpack.c.l.b16 %v293
    %v634 = vunpack.c.h.b16 %v293
    %v635 = vunpack.c.l.b16 %v294
    %v636 = vunpack.c.h.b16 %v294
    %v637 = vpack.c.b16 %v415, %v413
    %v638 = vpack.c.b16 %v416, %v414
    %v639 = vpack.c.b16 %v419, %v417
    %v640 = vpack.c.b16 %v420, %v418
    %v641 = vpack.c.b16 %v423, %v421
    %v642 = vpack.c.b16 %v424, %v422
    %v643 = vpack.c.b16 %v427, %v425
    %v644 = vpack.c.b16 %v428, %v426
    %v645 = vpack.c.b16 %v431, %v429
    %v646 = vpack.c.b16 %v432, %v430
    %v647 = vpack.c.b16 %v435, %v433
    %v648 = vpack.c.b16 %v436, %v434
    %v649 = vpack.c.b16 %v439, %v437
    %v650 = vpack.c.b16 %v440, %v438
    %v651 = vpack.c.b16 %v443, %v441
    %v652 = vpack.c.b16 %v444, %v442
    %v653 = vpack.c.b16 %v447, %v445
    %v654 = vpack.c.b16 %v448, %v446
    %v655 = vpack.c.b16 %v451, %v449
    %v656 = vpack.c.b16 %v452, %v450
    %v657 = vpack.c.b16 %v455, %v453
    %v658 = vpack.c.b16 %v456, %v454
    %v659 = vpack.c.b16 %v459, %v457
    %v660 = vpack.c.b16 %v460, %v458
    %v661 = vpack.c.b16 %v463, %v461
    %v662 = vpack.c.b16 %v464, %v462
    %v663 = vpack.c.b16 %v467, %v465
    %v664 = vpack.c.b16 %v468, %v466
    %v665 = vpack.c.b16 %v471, %v469
    %v666 = vpack.c.b16 %v472, %v470
    %v667 = vpack.c.b16 %v475, %v473
    %v668 = vpack.c.b16 %v476, %v474
    %v669 = vpack.c.b16 %v479, %v477
    %v670 = vpack.c.b16 %v480, %v478
    %v671 = vpack.c.b16 %v483, %v481
    %v672 = vpack.c.b16 %v484, %v482
    %v673 = vpack.c.b16 %v487, %v485
    %v674 = vpack.c.b16 %v488, %v486
    %v675 = vpack.c.b16 %v491, %v489
    %v676 = vpack.c.b16 %v492, %v490
    %v677 = vpack.c.b16 %v495, %v493
    %v678 = vpack.c.b16 %v496, %v494
    %v679 = vpack.c.b16 %v499, %v497
    %v680 = vpack.c.b16 %v500, %v498
    %v681 = vpack.c.b16 %v503, %v501
    %v682 = vpack.c.b16 %v504, %v502
    %v683 = vpack.c.b16 %v507, %v505
    %v684 = vpack.c.b16 %v508, %v506
    %v685 = vpack.c.b16 %v511, %v509
    %v686 = vpack.c.b16 %v512, %v510
    %v687 = vpack.c.b16 %v515, %v513
    %v688 = vpack.c.b16 %v516, %v514
    %v689 = vpack.c.b16 %v519, %v517
    %v690 = vpack.c.b16 %v520, %v518
    %v691 = vpack.c.b16 %v523, %v521
    %v692 = vpack.c.b16 %v524, %v522
    %v693 = vpack.c.b16 %v527, %v525
    %v694 = vpack.c.b16 %v528, %v526
    %v695 = vpack.c.b16 %v531, %v529
    %v696 = vpack.c.b16 %v532, %v530
    %v697 = vpack.c.b16 %v535, %v533
    %v698 = vpack.c.b16 %v536, %v534
    %v699 = vpack.c.b16 %v539, %v537
    %v700 = vpack.c.b16 %v540, %v538
    %v701 = vpack.c.b16 %v543, %v541
    %v702 = vpack.c.b16 %v544, %v542
    %v703 = vpack.c.b16 %v547, %v545
    %v704 = vpack.c.b16 %v548, %v546
    %v705 = vpack.c.b16 %v551, %v549
    %v706 = vpack.c.b16 %v552, %v550
    %v707 = vpack.c.b16 %v555, %v553
    %v708 = vpack.c.b16 %v556, %v554
    %v709 = vpack.c.b16 %v559, %v557
    %v710 = vpack.c.b16 %v560, %v558
    %v711 = vpack.c.b16 %v563, %v561
    %v712 = vpack.c.b16 %v564, %v562
    %v713 = vpack.c.b16 %v567, %v565
    %v714 = vpack.c.b16 %v568, %v566
    %v715 = vpack.c.b16 %v571, %v569
    %v716 = vpack.c.b16 %v572, %v570
    %v717 = vpack.c.b16 %v575, %v573
    %v718 = vpack.c.b16 %v576, %v574
    %v719 = vpack.c.b16 %v579, %v577
    %v720 = vpack.c.b16 %v580, %v578
    %v721 = vpack.c.b16 %v583, %v581
    %v722 = vpack.c.b16 %v584, %v582
    %v723 = vpack.c.b16 %v587, %v585
    %v724 = vpack.c.b16 %v588, %v586
    %v725 = vpack.c.b16 %v591, %v589
    %v726 = vpack.c.b16 %v592, %v590
    %v727 = vpack.c.b16 %v595, %v593
    %v728 = vpack.c.b16 %v596, %v594
    %v729 = vpack.c.b16 %v599, %v597
    %v730 = vpack.c.b16 %v600, %v598
    %v731 = vpack.c.b16 %v603, %v601
    %v732 = vpack.c.b16 %v604, %v602
    %v733 = vpack.c.b16 %v607, %v605
    %v734 = vpack.c.b16 %v608, %v606
    %v735 = vpack.c.b16 %v611, %v609
    %v736 = vpack.c.b16 %v612, %v610
    %v737 = vpack.c.b16 %v615, %v613
    %v738 = vpack.c.b16 %v616, %v614
    %v739 = vpack.c.b16 %v619, %v617
    %v740 = vpack.c.b16 %v620, %v618
    %v741 = vpack.c.b16 %v623, %v621
    %v742 = vpack.c.b16 %v624, %v622
    %v743 = vpack.c.b16 %v627, %v625
    %v744 = vpack.c.b16 %v628, %v626
    %v745 = vpack.c.b16 %v631, %v629
    %v746 = vpack.c.b16 %v632, %v630
    %v747 = vpack.c.b16 %v635, %v633
    %v748 = vpack.c.b16 %v636, %v634
    %861 = vmatpush.bf16.msra.mxu0 %v651
    %862 = vmatpush.bf16.msra.mxu0 %v649
    %863 = vmatpush.bf16.msra.mxu0 %v647
    %864 = vmatpush.bf16.msra.mxu0 %v645
    %865 = vmatpush.bf16.msra.mxu0 %v643
    %866 = vmatpush.bf16.msra.mxu0 %v641
    %867 = vmatpush.bf16.msra.mxu0 %v639
    %868 = vmatpush.bf16.msra.mxu0 %v637
    %869 = vmatmul.bf16.gmra.mxu0 %v176
    %v870 = vpop.f32.mrf.mxu0
    %v871 = vadd.f32 %v297, %v870
    %v872 = vpop.f32.mrf.mxu0
    %873 = vdwg.mxu0
    %874 = vmatpush.bf16.msra.mxu0 %v667
    %875 = vmatpush.bf16.msra.mxu0 %v665
    %876 = vmatpush.bf16.msra.mxu0 %v663
    %877 = vmatpush.bf16.msra.mxu0 %v661
    %878 = vmatpush.bf16.msra.mxu0 %v659
    %879 = vmatpush.bf16.msra.mxu0 %v657
    %880 = vmatpush.bf16.msra.mxu0 %v655
    %881 = vmatpush.bf16.msra.mxu0 %v653
    %882 = vmatmul.bf16.gmra.mxu0 %v177
    %v883 = vpop.f32.mrf.mxu0
    %v884 = vadd.f32 %v871, %v883
    %v885 = vpop.f32.mrf.mxu0
    %886 = vdwg.mxu0
    %887 = vmatpush.bf16.msra.mxu0 %v683
    %888 = vmatpush.bf16.msra.mxu0 %v681
    %889 = vmatpush.bf16.msra.mxu0 %v679
    %890 = vmatpush.bf16.msra.mxu0 %v677
    %891 = vmatpush.bf16.msra.mxu0 %v675
    %892 = vmatpush.bf16.msra.mxu0 %v673
    %893 = vmatpush.bf16.msra.mxu0 %v671
    %894 = vmatpush.bf16.msra.mxu0 %v669
    %895 = vmatmul.bf16.gmra.mxu0 %v178
    %v896 = vpop.f32.mrf.mxu0
    %v897 = vadd.f32 %v884, %v896
    %v898 = vpop.f32.mrf.mxu0
    %899 = vdwg.mxu0
    %900 = vmatpush.bf16.msra.mxu0 %v699
    %901 = vmatpush.bf16.msra.mxu0 %v697
    %902 = vmatpush.bf16.msra.mxu0 %v695
    %903 = vmatpush.bf16.msra.mxu0 %v693
    %904 = vmatpush.bf16.msra.mxu0 %v691
    %905 = vmatpush.bf16.msra.mxu0 %v689
    %906 = vmatpush.bf16.msra.mxu0 %v687
    %907 = vmatpush.bf16.msra.mxu0 %v685
    %908 = vmatmul.bf16.gmra.mxu0 %v179
    %v909 = vpop.f32.mrf.mxu0
    %v910 = vadd.f32 %v897, %v909
    %v911 = vpop.f32.mrf.mxu0
    %912 = vdwg.mxu0
    %913 = vmatpush.bf16.msra.mxu0 %v715
    %914 = vmatpush.bf16.msra.mxu0 %v713
    %915 = vmatpush.bf16.msra.mxu0 %v711
    %916 = vmatpush.bf16.msra.mxu0 %v709
    %917 = vmatpush.bf16.msra.mxu0 %v707
    %918 = vmatpush.bf16.msra.mxu0 %v705
    %919 = vmatpush.bf16.msra.mxu0 %v703
    %920 = vmatpush.bf16.msra.mxu0 %v701
    %921 = vmatmul.bf16.gmra.mxu0 %v180
    %v922 = vpop.f32.mrf.mxu0
    %v923 = vadd.f32 %v910, %v922
    %v924 = vpop.f32.mrf.mxu0
    %925 = vdwg.mxu0
    %926 = vmatpush.bf16.msra.mxu0 %v731
    %927 = vmatpush.bf16.msra.mxu0 %v729
    %928 = vmatpush.bf16.msra.mxu0 %v727
    %929 = vmatpush.bf16.msra.mxu0 %v725
    %930 = vmatpush.bf16.msra.mxu0 %v723
    %931 = vmatpush.bf16.msra.mxu0 %v721
    %932 = vmatpush.bf16.msra.mxu0 %v719
    %933 = vmatpush.bf16.msra.mxu0 %v717
    %934 = vmatmul.bf16.gmra.mxu0 %v181
    %v935 = vpop.f32.mrf.mxu0
    %v936 = vadd.f32 %v923, %v935
    %v937 = vpop.f32.mrf.mxu0
    %938 = vdwg.mxu0
    %939 = vmatpush.bf16.msra.mxu0 %v747
    %940 = vmatpush.bf16.msra.mxu0 %v745
    %941 = vmatpush.bf16.msra.mxu0 %v743
    %942 = vmatpush.bf16.msra.mxu0 %v741
    %943 = vmatpush.bf16.msra.mxu0 %v739
    %944 = vmatpush.bf16.msra.mxu0 %v737
    %945 = vmatpush.bf16.msra.mxu0 %v735
    %946 = vmatpush.bf16.msra.mxu0 %v733
    %947 = vmatmul.bf16.gmra.mxu0 %v182
    %v948 = vpop.f32.mrf.mxu0
    %v949 = vadd.f32 %v936, %v948
    %v950 = vpop.f32.mrf.mxu0
    %951 = vdwg.mxu0
    %952 = vmatpush.bf16.msra.mxu0 %v652
    %953 = vmatpush.bf16.msra.mxu0 %v650
    %954 = vmatpush.bf16.msra.mxu0 %v648
    %955 = vmatpush.bf16.msra.mxu0 %v646
    %956 = vmatpush.bf16.msra.mxu0 %v644
    %957 = vmatpush.bf16.msra.mxu0 %v642
    %958 = vmatpush.bf16.msra.mxu0 %v640
    %959 = vmatpush.bf16.msra.mxu0 %v638
    %960 = vmatmul.bf16.gmra.mxu0 %v176
    %v961 = vpop.f32.mrf.mxu0
    %v962 = vadd.f32 %v298, %v961
    %v963 = vpop.f32.mrf.mxu0
    %964 = vdwg.mxu0
    %965 = vmatpush.bf16.msra.mxu0 %v668
    %966 = vmatpush.bf16.msra.mxu0 %v666
    %967 = vmatpush.bf16.msra.mxu0 %v664
    %968 = vmatpush.bf16.msra.mxu0 %v662
    %969 = vmatpush.bf16.msra.mxu0 %v660
    %970 = vmatpush.bf16.msra.mxu0 %v658
    %971 = vmatpush.bf16.msra.mxu0 %v656
    %972 = vmatpush.bf16.msra.mxu0 %v654
    %973 = vmatmul.bf16.gmra.mxu0 %v177
    %v974 = vpop.f32.mrf.mxu0
    %v975 = vadd.f32 %v962, %v974
    %v976 = vpop.f32.mrf.mxu0
    %977 = vdwg.mxu0
    %978 = vmatpush.bf16.msra.mxu0 %v684
    %979 = vmatpush.bf16.msra.mxu0 %v682
    %980 = vmatpush.bf16.msra.mxu0 %v680
    %981 = vmatpush.bf16.msra.mxu0 %v678
    %982 = vmatpush.bf16.msra.mxu0 %v676
    %983 = vmatpush.bf16.msra.mxu0 %v674
    %984 = vmatpush.bf16.msra.mxu0 %v672
    %985 = vmatpush.bf16.msra.mxu0 %v670
    %986 = vmatmul.bf16.gmra.mxu0 %v178
    %v987 = vpop.f32.mrf.mxu0
    %v988 = vadd.f32 %v975, %v987
    %v989 = vpop.f32.mrf.mxu0
    %990 = vdwg.mxu0
    %991 = vmatpush.bf16.msra.mxu0 %v700
    %992 = vmatpush.bf16.msra.mxu0 %v698
    %993 = vmatpush.bf16.msra.mxu0 %v696
    %994 = vmatpush.bf16.msra.mxu0 %v694
    %995 = vmatpush.bf16.msra.mxu0 %v692
    %996 = vmatpush.bf16.msra.mxu0 %v690
    %997 = vmatpush.bf16.msra.mxu0 %v688
    %998 = vmatpush.bf16.msra.mxu0 %v686
    %999 = vmatmul.bf16.gmra.mxu0 %v179
    %v1000 = vpop.f32.mrf.mxu0
    %v1001 = vadd.f32 %v988, %v1000
    %v1002 = vpop.f32.mrf.mxu0
    %1003 = vdwg.mxu0
    %1004 = vmatpush.bf16.msra.mxu0 %v716
    %1005 = vmatpush.bf16.msra.mxu0 %v714
    %1006 = vmatpush.bf16.msra.mxu0 %v712
    %1007 = vmatpush.bf16.msra.mxu0 %v710
    %1008 = vmatpush.bf16.msra.mxu0 %v708
    %1009 = vmatpush.bf16.msra.mxu0 %v706
    %1010 = vmatpush.bf16.msra.mxu0 %v704
    %1011 = vmatpush.bf16.msra.mxu0 %v702
    %1012 = vmatmul.bf16.gmra.mxu0 %v180
    %v1013 = vpop.f32.mrf.mxu0
    %v1014 = vadd.f32 %v1001, %v1013
    %v1015 = vpop.f32.mrf.mxu0
    %1016 = vdwg.mxu0
    %1017 = vmatpush.bf16.msra.mxu0 %v732
    %1018 = vmatpush.bf16.msra.mxu0 %v730
    %1019 = vmatpush.bf16.msra.mxu0 %v728
    %1020 = vmatpush.bf16.msra.mxu0 %v726
    %1021 = vmatpush.bf16.msra.mxu0 %v724
    %1022 = vmatpush.bf16.msra.mxu0 %v722
    %1023 = vmatpush.bf16.msra.mxu0 %v720
    %1024 = vmatpush.bf16.msra.mxu0 %v718
    %1025 = vmatmul.bf16.gmra.mxu0 %v181
    %v1026 = vpop.f32.mrf.mxu0
    %v1027 = vadd.f32 %v1014, %v1026
    %v1028 = vpop.f32.mrf.mxu0
    %1029 = vdwg.mxu0
    %1030 = vmatpush.bf16.msra.mxu0 %v748
    %1031 = vmatpush.bf16.msra.mxu0 %v746
    %1032 = vmatpush.bf16.msra.mxu0 %v744
    %1033 = vmatpush.bf16.msra.mxu0 %v742
    %1034 = vmatpush.bf16.msra.mxu0 %v740
    %1035 = vmatpush.bf16.msra.mxu0 %v738
    %1036 = vmatpush.bf16.msra.mxu0 %v736
    %1037 = vmatpush.bf16.msra.mxu0 %v734
    %1038 = vmatmul.bf16.gmra.mxu0 %v182
    %v1039 = vpop.f32.mrf.mxu0
    %v1040 = vadd.f32 %v1027, %v1039
    %v1041 = vpop.f32.mrf.mxu0
    %1042 = vdwg.mxu0
    %v1043 = vmax.f32 %v949, 0.0
    %v1044 = vmax.f32 %v1040, 0.0
    %v1045 = vpack.c.bf16 %v1043, %v1043
    %v1046 = vpack.c.bf16 %v1044, %v1044
    %v1047 = vld [vmem:[#allocation10] sm:$0xff]
    %v1048 = vld [vmem:[#allocation10 + $0x8] sm:$0xff]
    %v1049 = vld [vmem:[#allocation10 + $0x10] sm:$0xff]
    %v1050 = vld [vmem:[#allocation10 + $0x18] sm:$0xff]
    %v1051 = vld [vmem:[#allocation10 + $0x20] sm:$0xff]
    %v1052 = vld [vmem:[#allocation10 + $0x28] sm:$0xff]
    %v1053 = vld [vmem:[#allocation10 + $0x30] sm:$0xff]
    %v1054 = vld [vmem:[#allocation10 + $0x38] sm:$0xff]
    %v1055 = vld [vmem:[#allocation10 + $0x40] sm:$0xff]
    %v1056 = vld [vmem:[#allocation10 + $0x48] sm:$0xff]
    %v1057 = vld [vmem:[#allocation10 + $0x50] sm:$0xff]
    %v1058 = vld [vmem:[#allocation10 + $0x58] sm:$0xff]
    %v1059 = vld [vmem:[#allocation10 + $0x60] sm:$0xff]
    %v1060 = vld [vmem:[#allocation10 + $0x68] sm:$0xff]
    %v1061 = vld [vmem:[#allocation10 + $0x70] sm:$0xff]
    %v1062 = vld [vmem:[#allocation10 + $0x78] sm:$0xff]
    %v1063 = vld [vmem:[#allocation10 + $0x80] sm:$0xff]
    %v1064 = vld [vmem:[#allocation10 + $0x88] sm:$0xff]
    %v1065 = vld [vmem:[#allocation10 + $0x90] sm:$0xff]
    %v1066 = vld [vmem:[#allocation10 + $0x98] sm:$0xff]
    %v1067 = vld [vmem:[#allocation10 + $0xa0] sm:$0xff]
    %v1068 = vld [vmem:[#allocation10 + $0xa8] sm:$0xff]
    %v1069 = vld [vmem:[#allocation10 + $0xb0] sm:$0xff]
    %v1070 = vld [vmem:[#allocation10 + $0xb8] sm:$0xff]
    %v1071 = vld [vmem:[#allocation10 + $0xc0] sm:$0xff]
    %v1072 = vld [vmem:[#allocation10 + $0xc8] sm:$0xff]
    %v1073 = vld [vmem:[#allocation10 + $0xd0] sm:$0xff]
    %v1074 = vld [vmem:[#allocation10 + $0xd8] sm:$0xff]
    %v1075 = vld [vmem:[#allocation10 + $0xe0] sm:$0xff]
    %v1076 = vld [vmem:[#allocation10 + $0xe8] sm:$0xff]
    %v1077 = vld [vmem:[#allocation10 + $0xf0] sm:$0xff]
    %v1078 = vld [vmem:[#allocation10 + $0xf8] sm:$0xff]
    %v1079 = vld [vmem:[#allocation11] sm:$0x3]
    %v1081 = vperm.slane %v1079, 0
    %v1082 = vperm.slane %v1079, 1
    %v1117 = vunpack.c.l.b16 %v1047
    %v1118 = vunpack.c.h.b16 %v1047
    %v1119 = vunpack.c.l.b16 %v1048
    %v1120 = vunpack.c.h.b16 %v1048
    %v1121 = vunpack.c.l.b16 %v1049
    %v1122 = vunpack.c.h.b16 %v1049
    %v1123 = vunpack.c.l.b16 %v1050
    %v1124 = vunpack.c.h.b16 %v1050
    %v1125 = vunpack.c.l.b16 %v1051
    %v1126 = vunpack.c.h.b16 %v1051
    %v1127 = vunpack.c.l.b16 %v1052
    %v1128 = vunpack.c.h.b16 %v1052
    %v1129 = vunpack.c.l.b16 %v1053
    %v1130 = vunpack.c.h.b16 %v1053
    %v1131 = vunpack.c.l.b16 %v1054
    %v1132 = vunpack.c.h.b16 %v1054
    %v1133 = vunpack.c.l.b16 %v1055
    %v1134 = vunpack.c.h.b16 %v1055
    %v1135 = vunpack.c.l.b16 %v1056
    %v1136 = vunpack.c.h.b16 %v1056
    %v1137 = vunpack.c.l.b16 %v1057
    %v1138 = vunpack.c.h.b16 %v1057
    %v1139 = vunpack.c.l.b16 %v1058
    %v1140 = vunpack.c.h.b16 %v1058
    %v1141 = vunpack.c.l.b16 %v1059
    %v1142 = vunpack.c.h.b16 %v1059
    %v1143 = vunpack.c.l.b16 %v1060
    %v1144 = vunpack.c.h.b16 %v1060
    %v1145 = vunpack.c.l.b16 %v1061
    %v1146 = vunpack.c.h.b16 %v1061
    %v1147 = vunpack.c.l.b16 %v1062
    %v1148 = vunpack.c.h.b16 %v1062
    %v1149 = vunpack.c.l.b16 %v1063
    %v1150 = vunpack.c.h.b16 %v1063
    %v1151 = vunpack.c.l.b16 %v1064
    %v1152 = vunpack.c.h.b16 %v1064
    %v1153 = vunpack.c.l.b16 %v1065
    %v1154 = vunpack.c.h.b16 %v1065
    %v1155 = vunpack.c.l.b16 %v1066
    %v1156 = vunpack.c.h.b16 %v1066
    %v1157 = vunpack.c.l.b16 %v1067
    %v1158 = vunpack.c.h.b16 %v1067
    %v1159 = vunpack.c.l.b16 %v1068
    %v1160 = vunpack.c.h.b16 %v1068
    %v1161 = vunpack.c.l.b16 %v1069
    %v1162 = vunpack.c.h.b16 %v1069
    %v1163 = vunpack.c.l.b16 %v1070
    %v1164 = vunpack.c.h.b16 %v1070
    %v1165 = vunpack.c.l.b16 %v1071
    %v1166 = vunpack.c.h.b16 %v1071
    %v1167 = vunpack.c.l.b16 %v1072
    %v1168 = vunpack.c.h.b16 %v1072
    %v1169 = vunpack.c.l.b16 %v1073
    %v1170 = vunpack.c.h.b16 %v1073
    %v1171 = vunpack.c.l.b16 %v1074
    %v1172 = vunpack.c.h.b16 %v1074
    %v1173 = vunpack.c.l.b16 %v1075
    %v1174 = vunpack.c.h.b16 %v1075
    %v1175 = vunpack.c.l.b16 %v1076
    %v1176 = vunpack.c.h.b16 %v1076
    %v1177 = vunpack.c.l.b16 %v1077
    %v1178 = vunpack.c.h.b16 %v1077
    %v1179 = vunpack.c.l.b16 %v1078
    %v1180 = vunpack.c.h.b16 %v1078
    %v1181 = vpack.c.b16 %v1119, %v1117
    %v1182 = vpack.c.b16 %v1120, %v1118
    %v1183 = vpack.c.b16 %v1123, %v1121
    %v1184 = vpack.c.b16 %v1124, %v1122
    %v1185 = vpack.c.b16 %v1127, %v1125
    %v1186 = vpack.c.b16 %v1128, %v1126
    %v1187 = vpack.c.b16 %v1131, %v1129
    %v1188 = vpack.c.b16 %v1132, %v1130
    %v1189 = vpack.c.b16 %v1135, %v1133
    %v1190 = vpack.c.b16 %v1136, %v1134
    %v1191 = vpack.c.b16 %v1139, %v1137
    %v1192 = vpack.c.b16 %v1140, %v1138
    %v1193 = vpack.c.b16 %v1143, %v1141
    %v1194 = vpack.c.b16 %v1144, %v1142
    %v1195 = vpack.c.b16 %v1147, %v1145
    %v1196 = vpack.c.b16 %v1148, %v1146
    %v1197 = vpack.c.b16 %v1151, %v1149
    %v1198 = vpack.c.b16 %v1152, %v1150
    %v1199 = vpack.c.b16 %v1155, %v1153
    %v1200 = vpack.c.b16 %v1156, %v1154
    %v1201 = vpack.c.b16 %v1159, %v1157
    %v1202 = vpack.c.b16 %v1160, %v1158
    %v1203 = vpack.c.b16 %v1163, %v1161
    %v1204 = vpack.c.b16 %v1164, %v1162
    %v1205 = vpack.c.b16 %v1167, %v1165
    %v1206 = vpack.c.b16 %v1168, %v1166
    %v1207 = vpack.c.b16 %v1171, %v1169
    %v1208 = vpack.c.b16 %v1172, %v1170
    %v1209 = vpack.c.b16 %v1175, %v1173
    %v1210 = vpack.c.b16 %v1176, %v1174
    %v1211 = vpack.c.b16 %v1179, %v1177
    %v1212 = vpack.c.b16 %v1180, %v1178
    %1245 = vmatpush.bf16.msra.mxu0 %v1195
    %1246 = vmatpush.bf16.msra.mxu0 %v1193
    %1247 = vmatpush.bf16.msra.mxu0 %v1191
    %1248 = vmatpush.bf16.msra.mxu0 %v1189
    %1249 = vmatpush.bf16.msra.mxu0 %v1187
    %1250 = vmatpush.bf16.msra.mxu0 %v1185
    %1251 = vmatpush.bf16.msra.mxu0 %v1183
    %1252 = vmatpush.bf16.msra.mxu0 %v1181
    %1253 = vmatmul.bf16.gmra.mxu0 %v1045
    %v1254 = vpop.f32.mrf.mxu0
    %v1255 = vadd.f32 %v1081, %v1254
    %v1256 = vpop.f32.mrf.mxu0
    %1257 = vdwg.mxu0
    %1258 = vmatpush.bf16.msra.mxu0 %v1211
    %1259 = vmatpush.bf16.msra.mxu0 %v1209
    %1260 = vmatpush.bf16.msra.mxu0 %v1207
    %1261 = vmatpush.bf16.msra.mxu0 %v1205
    %1262 = vmatpush.bf16.msra.mxu0 %v1203
    %1263 = vmatpush.bf16.msra.mxu0 %v1201
    %1264 = vmatpush.bf16.msra.mxu0 %v1199
    %1265 = vmatpush.bf16.msra.mxu0 %v1197
    %1266 = vmatmul.bf16.gmra.mxu0 %v1046
    %v1267 = vpop.f32.mrf.mxu0
    %v1268 = vadd.f32 %v1255, %v1267
    %v1269 = vpop.f32.mrf.mxu0
    %1270 = vdwg.mxu0
    %1271 = vmatpush.bf16.msra.mxu0 %v1196
    %1272 = vmatpush.bf16.msra.mxu0 %v1194
    %1273 = vmatpush.bf16.msra.mxu0 %v1192
    %1274 = vmatpush.bf16.msra.mxu0 %v1190
    %1275 = vmatpush.bf16.msra.mxu0 %v1188
    %1276 = vmatpush.bf16.msra.mxu0 %v1186
    %1277 = vmatpush.bf16.msra.mxu0 %v1184
    %1278 = vmatpush.bf16.msra.mxu0 %v1182
    %1279 = vmatmul.bf16.gmra.mxu0 %v1045
    %v1280 = vpop.f32.mrf.mxu0
    %v1281 = vadd.f32 %v1082, %v1280
    %v1282 = vpop.f32.mrf.mxu0
    %1283 = vdwg.mxu0
    %1284 = vmatpush.bf16.msra.mxu0 %v1212
    %1285 = vmatpush.bf16.msra.mxu0 %v1210
    %1286 = vmatpush.bf16.msra.mxu0 %v1208
    %1287 = vmatpush.bf16.msra.mxu0 %v1206
    %1288 = vmatpush.bf16.msra.mxu0 %v1204
    %1289 = vmatpush.bf16.msra.mxu0 %v1202
    %1290 = vmatpush.bf16.msra.mxu0 %v1200
    %1291 = vmatpush.bf16.msra.mxu0 %v1198
    %1292 = vmatmul.bf16.gmra.mxu0 %v1046
    %v1293 = vpop.f32.mrf.mxu0
    %v1294 = vadd.f32 %v1281, %v1293
    %v1295 = vpop.f32.mrf.mxu0
    %1296 = vdwg.mxu0
    %1297 = vst [vmem:[#allocation18] sm:$0xff] %v1268
    %1298 = vst [vmem:[#allocation18 + $0x8] sm:$0xff] %v1294
    %v1299 = vmul.f32 %v1294, 0.5
    %v1300 = vmul.f32 %v1299, 1.442695
    %v1301 = vpow.pop %v1300
    %v1302 = vld [vmem:[#allocation5] sm:$0xff]
    %v1303 = vmul.f32 %v1302, %v1301
    %v1304 = vadd.f32 %v1268, %v1303
    %v1305 = vpack.c.bf16 %v1304, %v1304
    %v1306 = vld [vmem:[#allocation13] sm:$0xff]
    %v1307 = vld [vmem:[#allocation13 + $0x8] sm:$0xff]
    %v1308 = vld [vmem:[#allocation13 + $0x10] sm:$0xff]
    %v1309 = vld [vmem:[#allocation13 + $0x18] sm:$0xff]
    %v1310 = vld [vmem:[#allocation13 + $0x20] sm:$0xff]
    %v1311 = vld [vmem:[#allocation13 + $0x28] sm:$0xff]
    %v1312 = vld [vmem:[#allocation13 + $0x30] sm:$0xff]
    %v1313 = vld [vmem:[#allocation13 + $0x38] sm:$0xff]
    %v1314 = vld [vmem:[#allocation13 + $0x40] sm:$0xff]
    %v1315 = vld [vmem:[#allocation13 + $0x48] sm:$0xff]
    %v1316 = vld [vmem:[#allocation13 + $0x50] sm:$0xff]
    %v1317 = vld [vmem:[#allocation13 + $0x58] sm:$0xff]
    %v1318 = vld [vmem:[#allocation13 + $0x60] sm:$0xff]
    %v1319 = vld [vmem:[#allocation13 + $0x68] sm:$0xff]
    %v1320 = vld [vmem:[#allocation13 + $0x70] sm:$0xff]
    %v1321 = vld [vmem:[#allocation13 + $0x78] sm:$0xff]
    %v1322 = vld [vmem:[#allocation14] sm:$0x3]
    %v1324 = vperm.slane %v1322, 0
    %v1325 = vperm.slane %v1322, 1
    %v1344 = vunpack.c.l.b16 %v1306
    %v1345 = vunpack.c.h.b16 %v1306
    %v1346 = vunpack.c.l.b16 %v1307
    %v1347 = vunpack.c.h.b16 %v1307
    %v1348 = vunpack.c.l.b16 %v1308
    %v1349 = vunpack.c.h.b16 %v1308
    %v1350 = vunpack.c.l.b16 %v1309
    %v1351 = vunpack.c.h.b16 %v1309
    %v1352 = vunpack.c.l.b16 %v1310
    %v1353 = vunpack.c.h.b16 %v1310
    %v1354 = vunpack.c.l.b16 %v1311
    %v1355 = vunpack.c.h.b16 %v1311
    %v1356 = vunpack.c.l.b16 %v1312
    %v1357 = vunpack.c.h.b16 %v1312
    %v1358 = vunpack.c.l.b16 %v1313
    %v1359 = vunpack.c.h.b16 %v1313
    %v1360 = vunpack.c.l.b16 %v1314
    %v1361 = vunpack.c.h.b16 %v1314
    %v1362 = vunpack.c.l.b16 %v1315
    %v1363 = vunpack.c.h.b16 %v1315
    %v1364 = vunpack.c.l.b16 %v1316
    %v1365 = vunpack.c.h.b16 %v1316
    %v1366 = vunpack.c.l.b16 %v1317
    %v1367 = vunpack.c.h.b16 %v1317
    %v1368 = vunpack.c.l.b16 %v1318
    %v1369 = vunpack.c.h.b16 %v1318
    %v1370 = vunpack.c.l.b16 %v1319
    %v1371 = vunpack.c.h.b16 %v1319
    %v1372 = vunpack.c.l.b16 %v1320
    %v1373 = vunpack.c.h.b16 %v1320
    %v1374 = vunpack.c.l.b16 %v1321
    %v1375 = vunpack.c.h.b16 %v1321
    %v1376 = vpack.c.b16 %v1346, %v1344
    %v1377 = vpack.c.b16 %v1347, %v1345
    %v1378 = vpack.c.b16 %v1350, %v1348
    %v1379 = vpack.c.b16 %v1351, %v1349
    %v1380 = vpack.c.b16 %v1354, %v1352
    %v1381 = vpack.c.b16 %v1355, %v1353
    %v1382 = vpack.c.b16 %v1358, %v1356
    %v1383 = vpack.c.b16 %v1359, %v1357
    %v1384 = vpack.c.b16 %v1362, %v1360
    %v1385 = vpack.c.b16 %v1363, %v1361
    %v1386 = vpack.c.b16 %v1366, %v1364
    %v1387 = vpack.c.b16 %v1367, %v1365
    %v1388 = vpack.c.b16 %v1370, %v1368
    %v1389 = vpack.c.b16 %v1371, %v1369
    %v1390 = vpack.c.b16 %v1374, %v1372
    %v1391 = vpack.c.b16 %v1375, %v1373
    %1408 = vmatpush.bf16.msra.mxu0 %v1390
    %1409 = vmatpush.bf16.msra.mxu0 %v1388
    %1410 = vmatpush.bf16.msra.mxu0 %v1386
    %1411 = vmatpush.bf16.msra.mxu0 %v1384
    %1412 = vmatpush.bf16.msra.mxu0 %v1382
    %1413 = vmatpush.bf16.msra.mxu0 %v1380
    %1414 = vmatpush.bf16.msra.mxu0 %v1378
    %1415 = vmatpush.bf16.msra.mxu0 %v1376
    %1416 = vmatmul.bf16.gmra.mxu0 %v1305
    %v1417 = vpop.f32.mrf.mxu0
    %v1418 = vadd.f32 %v1324, %v1417
    %v1419 = vpop.f32.mrf.mxu0
    %1420 = vdwg.mxu0
    %1421 = vmatpush.bf16.msra.mxu0 %v1391
    %1422 = vmatpush.bf16.msra.mxu0 %v1389
    %1423 = vmatpush.bf16.msra.mxu0 %v1387
    %1424 = vmatpush.bf16.msra.mxu0 %v1385
    %1425 = vmatpush.bf16.msra.mxu0 %v1383
    %1426 = vmatpush.bf16.msra.mxu0 %v1381
    %1427 = vmatpush.bf16.msra.mxu0 %v1379
    %1428 = vmatpush.bf16.msra.mxu0 %v1377
    %1429 = vmatmul.bf16.gmra.mxu0 %v1305
    %v1430 = vpop.f32.mrf.mxu0
    %v1431 = vadd.f32 %v1325, %v1430
    %v1432 = vpop.f32.mrf.mxu0
    %1433 = vdwg.mxu0
    %v1434 = vmax.f32 %v1418, 0.0
    %v1435 = vmax.f32 %v1431, 0.0
    %v1436 = vpack.c.bf16 %v1434, %v1434
    %v1437 = vpack.c.bf16 %v1435, %v1435
    %v1438 = vld [vmem:[#allocation16] sm:$0xff]
    %v1439 = vld [vmem:[#allocation16 + $0x8] sm:$0xff]
    %v1440 = vld [vmem:[#allocation16 + $0x10] sm:$0xff]
    %v1441 = vld [vmem:[#allocation16 + $0x18] sm:$0xf]
    %v1442 = vld [vmem:[#allocation16 + $0x1c] sm:$0xff]
    %v1443 = vld [vmem:[#allocation16 + $0x24] sm:$0xff]
    %v1444 = vld [vmem:[#allocation16 + $0x2c] sm:$0xff]
    %v1445 = vld [vmem:[#allocation16 + $0x34] sm:$0xf]
    %v1446 = vld [vmem:[#allocation16 + $0x38] sm:$0xff]
    %v1447 = vld [vmem:[#allocation16 + $0x40] sm:$0xff]
    %v1448 = vld [vmem:[#allocation16 + $0x48] sm:$0xff]
    %v1449 = vld [vmem:[#allocation16 + $0x50] sm:$0xf]
    %v1450 = vld [vmem:[#allocation16 + $0x54] sm:$0xff]
    %v1451 = vld [vmem:[#allocation16 + $0x5c] sm:$0xff]
    %v1452 = vld [vmem:[#allocation16 + $0x64] sm:$0xff]
    %v1453 = vld [vmem:[#allocation16 + $0x6c] sm:$0xf]
    %v1454 = vld [vmem:[#allocation16 + $0x70] sm:$0xff]
    %v1455 = vld [vmem:[#allocation16 + $0x78] sm:$0xff]
    %v1456 = vld [vmem:[#allocation16 + $0x80] sm:$0xff]
    %v1457 = vld [vmem:[#allocation16 + $0x88] sm:$0xf]
    %v1458 = vld [vmem:[#allocation16 + $0x8c] sm:$0xff]
    %v1459 = vld [vmem:[#allocation16 + $0x94] sm:$0xff]
    %v1460 = vld [vmem:[#allocation16 + $0x9c] sm:$0xff]
    %v1461 = vld [vmem:[#allocation16 + $0xa4] sm:$0xf]
    %v1462 = vld [vmem:[#allocation16 + $0xa8] sm:$0xff]
    %v1463 = vld [vmem:[#allocation16 + $0xb0] sm:$0xff]
    %v1464 = vld [vmem:[#allocation16 + $0xb8] sm:$0xff]
    %v1465 = vld [vmem:[#allocation16 + $0xc0] sm:$0xf]
    %v1466 = vld [vmem:[#allocation16 + $0xc4] sm:$0xff]
    %v1467 = vld [vmem:[#allocation16 + $0xcc] sm:$0xff]
    %v1468 = vld [vmem:[#allocation16 + $0xd4] sm:$0xff]
    %v1469 = vld [vmem:[#allocation16 + $0xdc] sm:$0xf]
    %v1470 = vld [vmem:[#allocation16 + $0xe0] sm:$0xff]
    %v1471 = vld [vmem:[#allocation16 + $0xe8] sm:$0xff]
    %v1472 = vld [vmem:[#allocation16 + $0xf0] sm:$0xff]
    %v1473 = vld [vmem:[#allocation16 + $0xf8] sm:$0xf]
    %v1474 = vld [vmem:[#allocation16 + $0xfc] sm:$0xff]
    %v1475 = vld [vmem:[#allocation16 + $0x104] sm:$0xff]
    %v1476 = vld [vmem:[#allocation16 + $0x10c] sm:$0xff]
    %v1477 = vld [vmem:[#allocation16 + $0x114] sm:$0xf]
    %v1478 = vld [vmem:[#allocation16 + $0x118] sm:$0xff]
    %v1479 = vld [vmem:[#allocation16 + $0x120] sm:$0xff]
    %v1480 = vld [vmem:[#allocation16 + $0x128] sm:$0xff]
    %v1481 = vld [vmem:[#allocation16 + $0x130] sm:$0xf]
    %v1482 = vld [vmem:[#allocation16 + $0x134] sm:$0xff]
    %v1483 = vld [vmem:[#allocation16 + $0x13c] sm:$0xff]
    %v1484 = vld [vmem:[#allocation16 + $0x144] sm:$0xff]
    %v1485 = vld [vmem:[#allocation16 + $0x14c] sm:$0xf]
    %v1486 = vld [vmem:[#allocation16 + $0x150] sm:$0xff]
    %v1487 = vld [vmem:[#allocation16 + $0x158] sm:$0xff]
    %v1488 = vld [vmem:[#allocation16 + $0x160] sm:$0xff]
    %v1489 = vld [vmem:[#allocation16 + $0x168] sm:$0xf]
    %v1490 = vld [vmem:[#allocation16 + $0x16c] sm:$0xff]
    %v1491 = vld [vmem:[#allocation16 + $0x174] sm:$0xff]
    %v1492 = vld [vmem:[#allocation16 + $0x17c] sm:$0xff]
    %v1493 = vld [vmem:[#allocation16 + $0x184] sm:$0xf]
    %v1494 = vld [vmem:[#allocation16 + $0x188] sm:$0xff]
    %v1495 = vld [vmem:[#allocation16 + $0x190] sm:$0xff]
    %v1496 = vld [vmem:[#allocation16 + $0x198] sm:$0xff]
    %v1497 = vld [vmem:[#allocation16 + $0x1a0] sm:$0xf]
    %v1498 = vld [vmem:[#allocation16 + $0x1a4] sm:$0xff]
    %v1499 = vld [vmem:[#allocation16 + $0x1ac] sm:$0xff]
    %v1500 = vld [vmem:[#allocation16 + $0x1b4] sm:$0xff]
    %v1501 = vld [vmem:[#allocation16 + $0x1bc] sm:$0xf]
    %v1502 = vld [vmem:[#allocation16 + $0x1c0] sm:$0xff]
    %v1503 = vld [vmem:[#allocation16 + $0x1c8] sm:$0xff]
    %v1504 = vld [vmem:[#allocation16 + $0x1d0] sm:$0xff]
    %v1505 = vld [vmem:[#allocation16 + $0x1d8] sm:$0xf]
    %v1506 = vld [vmem:[#allocation16 + $0x1dc] sm:$0xff]
    %v1507 = vld [vmem:[#allocation16 + $0x1e4] sm:$0xff]
    %v1508 = vld [vmem:[#allocation16 + $0x1ec] sm:$0xff]
    %v1509 = vld [vmem:[#allocation16 + $0x1f4] sm:$0xf]
    %v1510 = vld [vmem:[#allocation16 + $0x1f8] sm:$0xff]
    %v1511 = vld [vmem:[#allocation16 + $0x200] sm:$0xff]
    %v1512 = vld [vmem:[#allocation16 + $0x208] sm:$0xff]
    %v1513 = vld [vmem:[#allocation16 + $0x210] sm:$0xf]
    %v1514 = vld [vmem:[#allocation16 + $0x214] sm:$0xff]
    %v1515 = vld [vmem:[#allocation16 + $0x21c] sm:$0xff]
    %v1516 = vld [vmem:[#allocation16 + $0x224] sm:$0xff]
    %v1517 = vld [vmem:[#allocation16 + $0x22c] sm:$0xf]
    %v1518 = vld [vmem:[#allocation16 + $0x230] sm:$0xff]
    %v1519 = vld [vmem:[#allocation16 + $0x238] sm:$0xff]
    %v1520 = vld [vmem:[#allocation16 + $0x240] sm:$0xff]
    %v1521 = vld [vmem:[#allocation16 + $0x248] sm:$0xf]
    %v1522 = vld [vmem:[#allocation16 + $0x24c] sm:$0xff]
    %v1523 = vld [vmem:[#allocation16 + $0x254] sm:$0xff]
    %v1524 = vld [vmem:[#allocation16 + $0x25c] sm:$0xff]
    %v1525 = vld [vmem:[#allocation16 + $0x264] sm:$0xf]
    %v1526 = vld [vmem:[#allocation16 + $0x268] sm:$0xff]
    %v1527 = vld [vmem:[#allocation16 + $0x270] sm:$0xff]
    %v1528 = vld [vmem:[#allocation16 + $0x278] sm:$0xff]
    %v1529 = vld [vmem:[#allocation16 + $0x280] sm:$0xf]
    %v1530 = vld [vmem:[#allocation16 + $0x284] sm:$0xff]
    %v1531 = vld [vmem:[#allocation16 + $0x28c] sm:$0xff]
    %v1532 = vld [vmem:[#allocation16 + $0x294] sm:$0xff]
    %v1533 = vld [vmem:[#allocation16 + $0x29c] sm:$0xf]
    %v1534 = vld [vmem:[#allocation16 + $0x2a0] sm:$0xff]
    %v1535 = vld [vmem:[#allocation16 + $0x2a8] sm:$0xff]
    %v1536 = vld [vmem:[#allocation16 + $0x2b0] sm:$0xff]
    %v1537 = vld [vmem:[#allocation16 + $0x2b8] sm:$0xf]
    %v1538 = vld [vmem:[#allocation16 + $0x2bc] sm:$0xff]
    %v1539 = vld [vmem:[#allocation16 + $0x2c4] sm:$0xff]
    %v1540 = vld [vmem:[#allocation16 + $0x2cc] sm:$0xff]
    %v1541 = vld [vmem:[#allocation16 + $0x2d4] sm:$0xf]
    %v1542 = vld [vmem:[#allocation16 + $0x2d8] sm:$0xff]
    %v1543 = vld [vmem:[#allocation16 + $0x2e0] sm:$0xff]
    %v1544 = vld [vmem:[#allocation16 + $0x2e8] sm:$0xff]
    %v1545 = vld [vmem:[#allocation16 + $0x2f0] sm:$0xf]
    %v1546 = vld [vmem:[#allocation16 + $0x2f4] sm:$0xff]
    %v1547 = vld [vmem:[#allocation16 + $0x2fc] sm:$0xff]
    %v1548 = vld [vmem:[#allocation16 + $0x304] sm:$0xff]
    %v1549 = vld [vmem:[#allocation16 + $0x30c] sm:$0xf]
    %v1550 = vld [vmem:[#allocation16 + $0x310] sm:$0xff]
    %v1551 = vld [vmem:[#allocation16 + $0x318] sm:$0xff]
    %v1552 = vld [vmem:[#allocation16 + $0x320] sm:$0xff]
    %v1553 = vld [vmem:[#allocation16 + $0x328] sm:$0xf]
    %v1554 = vld [vmem:[#allocation16 + $0x32c] sm:$0xff]
    %v1555 = vld [vmem:[#allocation16 + $0x334] sm:$0xff]
    %v1556 = vld [vmem:[#allocation16 + $0x33c] sm:$0xff]
    %v1557 = vld [vmem:[#allocation16 + $0x344] sm:$0xf]
    %v1558 = vld [vmem:[#allocation16 + $0x348] sm:$0xff]
    %v1559 = vld [vmem:[#allocation16 + $0x350] sm:$0xff]
    %v1560 = vld [vmem:[#allocation16 + $0x358] sm:$0xff]
    %v1561 = vld [vmem:[#allocation16 + $0x360] sm:$0xf]
    %v1562 = vld [vmem:[#allocation16 + $0x364] sm:$0xff]
    %v1563 = vld [vmem:[#allocation16 + $0x36c] sm:$0xff]
    %v1564 = vld [vmem:[#allocation16 + $0x374] sm:$0xff]
    %v1565 = vld [vmem:[#allocation16 + $0x37c] sm:$0xf]
    %v1566 = vld [vmem:[%s9] sm:$0xff]
    %v1568 = vperm.slane %v1566, 0
    %v1569 = vperm.slane %v1566, 1
    %v1570 = vperm.slane %v1566, 2
    %v1571 = vperm.slane %v1566, 3
    %v1572 = vperm.slane %v1566, 4
    %v1573 = vperm.slane %v1566, 5
    %v1574 = vperm.slane %v1566, 6
    %v1710 = vunpack.c.l.b16 %v1438
    %v1711 = vunpack.c.h.b16 %v1438
    %v1712 = vunpack.c.l.b16 %v1439
    %v1713 = vunpack.c.h.b16 %v1439
    %v1714 = vunpack.c.l.b16 %v1440
    %v1715 = vunpack.c.h.b16 %v1440
    %v1716 = vunpack.c.l.b16 %v1441
    %v1717 = vunpack.c.l.b16 %v1442
    %v1718 = vunpack.c.h.b16 %v1442
    %v1719 = vunpack.c.l.b16 %v1443
    %v1720 = vunpack.c.h.b16 %v1443
    %v1721 = vunpack.c.l.b16 %v1444
    %v1722 = vunpack.c.h.b16 %v1444
    %v1723 = vunpack.c.l.b16 %v1445
    %v1724 = vunpack.c.l.b16 %v1446
    %v1725 = vunpack.c.h.b16 %v1446
    %v1726 = vunpack.c.l.b16 %v1447
    %v1727 = vunpack.c.h.b16 %v1447
    %v1728 = vunpack.c.l.b16 %v1448
    %v1729 = vunpack.c.h.b16 %v1448
    %v1730 = vunpack.c.l.b16 %v1449
    %v1731 = vunpack.c.l.b16 %v1450
    %v1732 = vunpack.c.h.b16 %v1450
    %v1733 = vunpack.c.l.b16 %v1451
    %v1734 = vunpack.c.h.b16 %v1451
    %v1735 = vunpack.c.l.b16 %v1452
    %v1736 = vunpack.c.h.b16 %v1452
    %v1737 = vunpack.c.l.b16 %v1453
    %v1738 = vunpack.c.l.b16 %v1454
    %v1739 = vunpack.c.h.b16 %v1454
    %v1740 = vunpack.c.l.b16 %v1455
    %v1741 = vunpack.c.h.b16 %v1455
    %v1742 = vunpack.c.l.b16 %v1456
    %v1743 = vunpack.c.h.b16 %v1456
    %v1744 = vunpack.c.l.b16 %v1457
    %v1745 = vunpack.c.l.b16 %v1458
    %v1746 = vunpack.c.h.b16 %v1458
    %v1747 = vunpack.c.l.b16 %v1459
    %v1748 = vunpack.c.h.b16 %v1459
    %v1749 = vunpack.c.l.b16 %v1460
    %v1750 = vunpack.c.h.b16 %v1460
    %v1751 = vunpack.c.l.b16 %v1461
    %v1752 = vunpack.c.l.b16 %v1462
    %v1753 = vunpack.c.h.b16 %v1462
    %v1754 = vunpack.c.l.b16 %v1463
    %v1755 = vunpack.c.h.b16 %v1463
    %v1756 = vunpack.c.l.b16 %v1464
    %v1757 = vunpack.c.h.b16 %v1464
    %v1758 = vunpack.c.l.b16 %v1465
    %v1759 = vunpack.c.l.b16 %v1466
    %v1760 = vunpack.c.h.b16 %v1466
    %v1761 = vunpack.c.l.b16 %v1467
    %v1762 = vunpack.c.h.b16 %v1467
    %v1763 = vunpack.c.l.b16 %v1468
    %v1764 = vunpack.c.h.b16 %v1468
    %v1765 = vunpack.c.l.b16 %v1469
    %v1766 = vunpack.c.l.b16 %v1470
    %v1767 = vunpack.c.h.b16 %v1470
    %v1768 = vunpack.c.l.b16 %v1471
    %v1769 = vunpack.c.h.b16 %v1471
    %v1770 = vunpack.c.l.b16 %v1472
    %v1771 = vunpack.c.h.b16 %v1472
    %v1772 = vunpack.c.l.b16 %v1473
    %v1773 = vunpack.c.l.b16 %v1474
    %v1774 = vunpack.c.h.b16 %v1474
    %v1775 = vunpack.c.l.b16 %v1475
    %v1776 = vunpack.c.h.b16 %v1475
    %v1777 = vunpack.c.l.b16 %v1476
    %v1778 = vunpack.c.h.b16 %v1476
    %v1779 = vunpack.c.l.b16 %v1477
    %v1780 = vunpack.c.l.b16 %v1478
    %v1781 = vunpack.c.h.b16 %v1478
    %v1782 = vunpack.c.l.b16 %v1479
    %v1783 = vunpack.c.h.b16 %v1479
    %v1784 = vunpack.c.l.b16 %v1480
    %v1785 = vunpack.c.h.b16 %v1480
    %v1786 = vunpack.c.l.b16 %v1481
    %v1787 = vunpack.c.l.b16 %v1482
    %v1788 = vunpack.c.h.b16 %v1482
    %v1789 = vunpack.c.l.b16 %v1483
    %v1790 = vunpack.c.h.b16 %v1483
    %v1791 = vunpack.c.l.b16 %v1484
    %v1792 = vunpack.c.h.b16 %v1484
    %v1793 = vunpack.c.l.b16 %v1485
    %v1794 = vunpack.c.l.b16 %v1486
    %v1795 = vunpack.c.h.b16 %v1486
    %v1796 = vunpack.c.l.b16 %v1487
    %v1797 = vunpack.c.h.b16 %v1487
    %v1798 = vunpack.c.l.b16 %v1488
    %v1799 = vunpack.c.h.b16 %v1488
    %v1800 = vunpack.c.l.b16 %v1489
    %v1801 = vunpack.c.l.b16 %v1490
    %v1802 = vunpack.c.h.b16 %v1490
    %v1803 = vunpack.c.l.b16 %v1491
    %v1804 = vunpack.c.h.b16 %v1491
    %v1805 = vunpack.c.l.b16 %v1492
    %v1806 = vunpack.c.h.b16 %v1492
    %v1807 = vunpack.c.l.b16 %v1493
    %v1808 = vunpack.c.l.b16 %v1494
    %v1809 = vunpack.c.h.b16 %v1494
    %v1810 = vunpack.c.l.b16 %v1495
    %v1811 = vunpack.c.h.b16 %v1495
    %v1812 = vunpack.c.l.b16 %v1496
    %v1813 = vunpack.c.h.b16 %v1496
    %v1814 = vunpack.c.l.b16 %v1497
    %v1815 = vunpack.c.l.b16 %v1498
    %v1816 = vunpack.c.h.b16 %v1498
    %v1817 = vunpack.c.l.b16 %v1499
    %v1818 = vunpack.c.h.b16 %v1499
    %v1819 = vunpack.c.l.b16 %v1500
    %v1820 = vunpack.c.h.b16 %v1500
    %v1821 = vunpack.c.l.b16 %v1501
    %v1822 = vunpack.c.l.b16 %v1502
    %v1823 = vunpack.c.h.b16 %v1502
    %v1824 = vunpack.c.l.b16 %v1503
    %v1825 = vunpack.c.h.b16 %v1503
    %v1826 = vunpack.c.l.b16 %v1504
    %v1827 = vunpack.c.h.b16 %v1504
    %v1828 = vunpack.c.l.b16 %v1505
    %v1829 = vunpack.c.l.b16 %v1506
    %v1830 = vunpack.c.h.b16 %v1506
    %v1831 = vunpack.c.l.b16 %v1507
    %v1832 = vunpack.c.h.b16 %v1507
    %v1833 = vunpack.c.l.b16 %v1508
    %v1834 = vunpack.c.h.b16 %v1508
    %v1835 = vunpack.c.l.b16 %v1509
    %v1836 = vunpack.c.l.b16 %v1510
    %v1837 = vunpack.c.h.b16 %v1510
    %v1838 = vunpack.c.l.b16 %v1511
    %v1839 = vunpack.c.h.b16 %v1511
    %v1840 = vunpack.c.l.b16 %v1512
    %v1841 = vunpack.c.h.b16 %v1512
    %v1842 = vunpack.c.l.b16 %v1513
    %v1843 = vunpack.c.l.b16 %v1514
    %v1844 = vunpack.c.h.b16 %v1514
    %v1845 = vunpack.c.l.b16 %v1515
    %v1846 = vunpack.c.h.b16 %v1515
    %v1847 = vunpack.c.l.b16 %v1516
    %v1848 = vunpack.c.h.b16 %v1516
    %v1849 = vunpack.c.l.b16 %v1517
    %v1850 = vunpack.c.l.b16 %v1518
    %v1851 = vunpack.c.h.b16 %v1518
    %v1852 = vunpack.c.l.b16 %v1519
    %v1853 = vunpack.c.h.b16 %v1519
    %v1854 = vunpack.c.l.b16 %v1520
    %v1855 = vunpack.c.h.b16 %v1520
    %v1856 = vunpack.c.l.b16 %v1521
    %v1857 = vunpack.c.l.b16 %v1522
    %v1858 = vunpack.c.h.b16 %v1522
    %v1859 = vunpack.c.l.b16 %v1523
    %v1860 = vunpack.c.h.b16 %v1523
    %v1861 = vunpack.c.l.b16 %v1524
    %v1862 = vunpack.c.h.b16 %v1524
    %v1863 = vunpack.c.l.b16 %v1525
    %v1864 = vunpack.c.l.b16 %v1526
    %v1865 = vunpack.c.h.b16 %v1526
    %v1866 = vunpack.c.l.b16 %v1527
    %v1867 = vunpack.c.h.b16 %v1527
    %v1868 = vunpack.c.l.b16 %v1528
    %v1869 = vunpack.c.h.b16 %v1528
    %v1870 = vunpack.c.l.b16 %v1529
    %v1871 = vunpack.c.l.b16 %v1530
    %v1872 = vunpack.c.h.b16 %v1530
    %v1873 = vunpack.c.l.b16 %v1531
    %v1874 = vunpack.c.h.b16 %v1531
    %v1875 = vunpack.c.l.b16 %v1532
    %v1876 = vunpack.c.h.b16 %v1532
    %v1877 = vunpack.c.l.b16 %v1533
    %v1878 = vunpack.c.l.b16 %v1534
    %v1879 = vunpack.c.h.b16 %v1534
    %v1880 = vunpack.c.l.b16 %v1535
    %v1881 = vunpack.c.h.b16 %v1535
    %v1882 = vunpack.c.l.b16 %v1536
    %v1883 = vunpack.c.h.b16 %v1536
    %v1884 = vunpack.c.l.b16 %v1537
    %v1885 = vunpack.c.l.b16 %v1538
    %v1886 = vunpack.c.h.b16 %v1538
    %v1887 = vunpack.c.l.b16 %v1539
    %v1888 = vunpack.c.h.b16 %v1539
    %v1889 = vunpack.c.l.b16 %v1540
    %v1890 = vunpack.c.h.b16 %v1540
    %v1891 = vunpack.c.l.b16 %v1541
    %v1892 = vunpack.c.l.b16 %v1542
    %v1893 = vunpack.c.h.b16 %v1542
    %v1894 = vunpack.c.l.b16 %v1543
    %v1895 = vunpack.c.h.b16 %v1543
    %v1896 = vunpack.c.l.b16 %v1544
    %v1897 = vunpack.c.h.b16 %v1544
    %v1898 = vunpack.c.l.b16 %v1545
    %v1899 = vunpack.c.l.b16 %v1546
    %v1900 = vunpack.c.h.b16 %v1546
    %v1901 = vunpack.c.l.b16 %v1547
    %v1902 = vunpack.c.h.b16 %v1547
    %v1903 = vunpack.c.l.b16 %v1548
    %v1904 = vunpack.c.h.b16 %v1548
    %v1905 = vunpack.c.l.b16 %v1549
    %v1906 = vunpack.c.l.b16 %v1550
    %v1907 = vunpack.c.h.b16 %v1550
    %v1908 = vunpack.c.l.b16 %v1551
    %v1909 = vunpack.c.h.b16 %v1551
    %v1910 = vunpack.c.l.b16 %v1552
    %v1911 = vunpack.c.h.b16 %v1552
    %v1912 = vunpack.c.l.b16 %v1553
    %v1913 = vunpack.c.l.b16 %v1554
    %v1914 = vunpack.c.h.b16 %v1554
    %v1915 = vunpack.c.l.b16 %v1555
    %v1916 = vunpack.c.h.b16 %v1555
    %v1917 = vunpack.c.l.b16 %v1556
    %v1918 = vunpack.c.h.b16 %v1556
    %v1919 = vunpack.c.l.b16 %v1557
    %v1920 = vunpack.c.l.b16 %v1558
    %v1921 = vunpack.c.h.b16 %v1558
    %v1922 = vunpack.c.l.b16 %v1559
    %v1923 = vunpack.c.h.b16 %v1559
    %v1924 = vunpack.c.l.b16 %v1560
    %v1925 = vunpack.c.h.b16 %v1560
    %v1926 = vunpack.c.l.b16 %v1561
    %v1927 = vunpack.c.l.b16 %v1562
    %v1928 = vunpack.c.h.b16 %v1562
    %v1929 = vunpack.c.l.b16 %v1563
    %v1930 = vunpack.c.h.b16 %v1563
    %v1931 = vunpack.c.l.b16 %v1564
    %v1932 = vunpack.c.h.b16 %v1564
    %v1933 = vunpack.c.l.b16 %v1565
    %v1934 = vpack.c.b16 %v1717, %v1710
    %v1935 = vpack.c.b16 %v1718, %v1711
    %v1936 = vpack.c.b16 %v1719, %v1712
    %v1937 = vpack.c.b16 %v1720, %v1713
    %v1938 = vpack.c.b16 %v1721, %v1714
    %v1939 = vpack.c.b16 %v1722, %v1715
    %v1940 = vpack.c.b16 %v1723, %v1716
    %v1941 = vpack.c.b16 %v1731, %v1724
    %v1942 = vpack.c.b16 %v1732, %v1725
    %v1943 = vpack.c.b16 %v1733, %v1726
    %v1944 = vpack.c.b16 %v1734, %v1727
    %v1945 = vpack.c.b16 %v1735, %v1728
    %v1946 = vpack.c.b16 %v1736, %v1729
    %v1947 = vpack.c.b16 %v1737, %v1730
    %v1948 = vpack.c.b16 %v1745, %v1738
    %v1949 = vpack.c.b16 %v1746, %v1739
    %v1950 = vpack.c.b16 %v1747, %v1740
    %v1951 = vpack.c.b16 %v1748, %v1741
    %v1952 = vpack.c.b16 %v1749, %v1742
    %v1953 = vpack.c.b16 %v1750, %v1743
    %v1954 = vpack.c.b16 %v1751, %v1744
    %v1955 = vpack.c.b16 %v1759, %v1752
    %v1956 = vpack.c.b16 %v1760, %v1753
    %v1957 = vpack.c.b16 %v1761, %v1754
    %v1958 = vpack.c.b16 %v1762, %v1755
    %v1959 = vpack.c.b16 %v1763, %v1756
    %v1960 = vpack.c.b16 %v1764, %v1757
    %v1961 = vpack.c.b16 %v1765, %v1758
    %v1962 = vpack.c.b16 %v1773, %v1766
    %v1963 = vpack.c.b16 %v1774, %v1767
    %v1964 = vpack.c.b16 %v1775, %v1768
    %v1965 = vpack.c.b16 %v1776, %v1769
    %v1966 = vpack.c.b16 %v1777, %v1770
    %v1967 = vpack.c.b16 %v1778, %v1771
    %v1968 = vpack.c.b16 %v1779, %v1772
    %v1969 = vpack.c.b16 %v1787, %v1780
    %v1970 = vpack.c.b16 %v1788, %v1781
    %v1971 = vpack.c.b16 %v1789, %v1782
    %v1972 = vpack.c.b16 %v1790, %v1783
    %v1973 = vpack.c.b16 %v1791, %v1784
    %v1974 = vpack.c.b16 %v1792, %v1785
    %v1975 = vpack.c.b16 %v1793, %v1786
    %v1976 = vpack.c.b16 %v1801, %v1794
    %v1977 = vpack.c.b16 %v1802, %v1795
    %v1978 = vpack.c.b16 %v1803, %v1796
    %v1979 = vpack.c.b16 %v1804, %v1797
    %v1980 = vpack.c.b16 %v1805, %v1798
    %v1981 = vpack.c.b16 %v1806, %v1799
    %v1982 = vpack.c.b16 %v1807, %v1800
    %v1983 = vpack.c.b16 %v1815, %v1808
    %v1984 = vpack.c.b16 %v1816, %v1809
    %v1985 = vpack.c.b16 %v1817, %v1810
    %v1986 = vpack.c.b16 %v1818, %v1811
    %v1987 = vpack.c.b16 %v1819, %v1812
    %v1988 = vpack.c.b16 %v1820, %v1813
    %v1989 = vpack.c.b16 %v1821, %v1814
    %v1990 = vpack.c.b16 %v1829, %v1822
    %v1991 = vpack.c.b16 %v1830, %v1823
    %v1992 = vpack.c.b16 %v1831, %v1824
    %v1993 = vpack.c.b16 %v1832, %v1825
    %v1994 = vpack.c.b16 %v1833, %v1826
    %v1995 = vpack.c.b16 %v1834, %v1827
    %v1996 = vpack.c.b16 %v1835, %v1828
    %v1997 = vpack.c.b16 %v1843, %v1836
    %v1998 = vpack.c.b16 %v1844, %v1837
    %v1999 = vpack.c.b16 %v1845, %v1838
    %v2000 = vpack.c.b16 %v1846, %v1839
    %v2001 = vpack.c.b16 %v1847, %v1840
    %v2002 = vpack.c.b16 %v1848, %v1841
    %v2003 = vpack.c.b16 %v1849, %v1842
    %v2004 = vpack.c.b16 %v1857, %v1850
    %v2005 = vpack.c.b16 %v1858, %v1851
    %v2006 = vpack.c.b16 %v1859, %v1852
    %v2007 = vpack.c.b16 %v1860, %v1853
    %v2008 = vpack.c.b16 %v1861, %v1854
    %v2009 = vpack.c.b16 %v1862, %v1855
    %v2010 = vpack.c.b16 %v1863, %v1856
    %v2011 = vpack.c.b16 %v1871, %v1864
    %v2012 = vpack.c.b16 %v1872, %v1865
    %v2013 = vpack.c.b16 %v1873, %v1866
    %v2014 = vpack.c.b16 %v1874, %v1867
    %v2015 = vpack.c.b16 %v1875, %v1868
    %v2016 = vpack.c.b16 %v1876, %v1869
    %v2017 = vpack.c.b16 %v1877, %v1870
    %v2018 = vpack.c.b16 %v1885, %v1878
    %v2019 = vpack.c.b16 %v1886, %v1879
    %v2020 = vpack.c.b16 %v1887, %v1880
    %v2021 = vpack.c.b16 %v1888, %v1881
    %v2022 = vpack.c.b16 %v1889, %v1882
    %v2023 = vpack.c.b16 %v1890, %v1883
    %v2024 = vpack.c.b16 %v1891, %v1884
    %v2025 = vpack.c.b16 %v1899, %v1892
    %v2026 = vpack.c.b16 %v1900, %v1893
    %v2027 = vpack.c.b16 %v1901, %v1894
    %v2028 = vpack.c.b16 %v1902, %v1895
    %v2029 = vpack.c.b16 %v1903, %v1896
    %v2030 = vpack.c.b16 %v1904, %v1897
    %v2031 = vpack.c.b16 %v1905, %v1898
    %v2032 = vpack.c.b16 %v1913, %v1906
    %v2033 = vpack.c.b16 %v1914, %v1907
    %v2034 = vpack.c.b16 %v1915, %v1908
    %v2035 = vpack.c.b16 %v1916, %v1909
    %v2036 = vpack.c.b16 %v1917, %v1910
    %v2037 = vpack.c.b16 %v1918, %v1911
    %v2038 = vpack.c.b16 %v1919, %v1912
    %v2039 = vpack.c.b16 %v1927, %v1920
    %v2040 = vpack.c.b16 %v1928, %v1921
    %v2041 = vpack.c.b16 %v1929, %v1922
    %v2042 = vpack.c.b16 %v1930, %v1923
    %v2043 = vpack.c.b16 %v1931, %v1924
    %v2044 = vpack.c.b16 %v1932, %v1925
    %v2045 = vpack.c.b16 %v1933, %v1926
    %2158 = vmatpush.bf16.msra.mxu0 %v1983
    %2159 = vmatpush.bf16.msra.mxu0 %v1976
    %2160 = vmatpush.bf16.msra.mxu0 %v1969
    %2161 = vmatpush.bf16.msra.mxu0 %v1962
    %2162 = vmatpush.bf16.msra.mxu0 %v1955
    %2163 = vmatpush.bf16.msra.mxu0 %v1948
    %2164 = vmatpush.bf16.msra.mxu0 %v1941
    %2165 = vmatpush.bf16.msra.mxu0 %v1934
    %2166 = vmatmul.bf16.gmra.mxu0 %v1436
    %v2167 = vpop.f32.mrf.mxu0
    %v2168 = vadd.f32 %v1568, %v2167
    %v2169 = vpop.f32.mrf.mxu0
    %2170 = vdwg.mxu0
    %2171 = vmatpush.bf16.msra.mxu0 %v2039
    %2172 = vmatpush.bf16.msra.mxu0 %v2032
    %2173 = vmatpush.bf16.msra.mxu0 %v2025
    %2174 = vmatpush.bf16.msra.mxu0 %v2018
    %2175 = vmatpush.bf16.msra.mxu0 %v2011
    %2176 = vmatpush.bf16.msra.mxu0 %v2004
    %2177 = vmatpush.bf16.msra.mxu0 %v1997
    %2178 = vmatpush.bf16.msra.mxu0 %v1990
    %2179 = vmatmul.bf16.gmra.mxu0 %v1437
    %v2180 = vpop.f32.mrf.mxu0
    %v2181 = vadd.f32 %v2168, %v2180
    %v2182 = vpop.f32.mrf.mxu0
    %2183 = vdwg.mxu0
    %2184 = vmatpush.bf16.msra.mxu0 %v1984
    %2185 = vmatpush.bf16.msra.mxu0 %v1977
    %2186 = vmatpush.bf16.msra.mxu0 %v1970
    %2187 = vmatpush.bf16.msra.mxu0 %v1963
    %2188 = vmatpush.bf16.msra.mxu0 %v1956
    %2189 = vmatpush.bf16.msra.mxu0 %v1949
    %2190 = vmatpush.bf16.msra.mxu0 %v1942
    %2191 = vmatpush.bf16.msra.mxu0 %v1935
    %2192 = vmatmul.bf16.gmra.mxu0 %v1436
    %v2193 = vpop.f32.mrf.mxu0
    %v2194 = vadd.f32 %v1569, %v2193
    %v2195 = vpop.f32.mrf.mxu0
    %2196 = vdwg.mxu0
    %2197 = vmatpush.bf16.msra.mxu0 %v2040
    %2198 = vmatpush.bf16.msra.mxu0 %v2033
    %2199 = vmatpush.bf16.msra.mxu0 %v2026
    %2200 = vmatpush.bf16.msra.mxu0 %v2019
    %2201 = vmatpush.bf16.msra.mxu0 %v2012
    %2202 = vmatpush.bf16.msra.mxu0 %v2005
    %2203 = vmatpush.bf16.msra.mxu0 %v1998
    %2204 = vmatpush.bf16.msra.mxu0 %v1991
    %2205 = vmatmul.bf16.gmra.mxu0 %v1437
    %v2206 = vpop.f32.mrf.mxu0
    %v2207 = vadd.f32 %v2194, %v2206
    %v2208 = vpop.f32.mrf.mxu0
    %2209 = vdwg.mxu0
    %2210 = vmatpush.bf16.msra.mxu0 %v1985
    %2211 = vmatpush.bf16.msra.mxu0 %v1978
    %2212 = vmatpush.bf16.msra.mxu0 %v1971
    %2213 = vmatpush.bf16.msra.mxu0 %v1964
    %2214 = vmatpush.bf16.msra.mxu0 %v1957
    %2215 = vmatpush.bf16.msra.mxu0 %v1950
    %2216 = vmatpush.bf16.msra.mxu0 %v1943
    %2217 = vmatpush.bf16.msra.mxu0 %v1936
    %2218 = vmatmul.bf16.gmra.mxu0 %v1436
    %v2219 = vpop.f32.mrf.mxu0
    %v2220 = vadd.f32 %v1570, %v2219
    %v2221 = vpop.f32.mrf.mxu0
    %2222 = vdwg.mxu0
    %2223 = vmatpush.bf16.msra.mxu0 %v2041
    %2224 = vmatpush.bf16.msra.mxu0 %v2034
    %2225 = vmatpush.bf16.msra.mxu0 %v2027
    %2226 = vmatpush.bf16.msra.mxu0 %v2020
    %2227 = vmatpush.bf16.msra.mxu0 %v2013
    %2228 = vmatpush.bf16.msra.mxu0 %v2006
    %2229 = vmatpush.bf16.msra.mxu0 %v1999
    %2230 = vmatpush.bf16.msra.mxu0 %v1992
    %2231 = vmatmul.bf16.gmra.mxu0 %v1437
    %v2232 = vpop.f32.mrf.mxu0
    %v2233 = vadd.f32 %v2220, %v2232
    %v2234 = vpop.f32.mrf.mxu0
    %2235 = vdwg.mxu0
    %2236 = vmatpush.bf16.msra.mxu0 %v1986
    %2237 = vmatpush.bf16.msra.mxu0 %v1979
    %2238 = vmatpush.bf16.msra.mxu0 %v1972
    %2239 = vmatpush.bf16.msra.mxu0 %v1965
    %2240 = vmatpush.bf16.msra.mxu0 %v1958
    %2241 = vmatpush.bf16.msra.mxu0 %v1951
    %2242 = vmatpush.bf16.msra.mxu0 %v1944
    %2243 = vmatpush.bf16.msra.mxu0 %v1937
    %2244 = vmatmul.bf16.gmra.mxu0 %v1436
    %v2245 = vpop.f32.mrf.mxu0
    %v2246 = vadd.f32 %v1571, %v2245
    %v2247 = vpop.f32.mrf.mxu0
    %2248 = vdwg.mxu0
    %2249 = vmatpush.bf16.msra.mxu0 %v2042
    %2250 = vmatpush.bf16.msra.mxu0 %v2035
    %2251 = vmatpush.bf16.msra.mxu0 %v2028
    %2252 = vmatpush.bf16.msra.mxu0 %v2021
    %2253 = vmatpush.bf16.msra.mxu0 %v2014
    %2254 = vmatpush.bf16.msra.mxu0 %v2007
    %2255 = vmatpush.bf16.msra.mxu0 %v2000
    %2256 = vmatpush.bf16.msra.mxu0 %v1993
    %2257 = vmatmul.bf16.gmra.mxu0 %v1437
    %v2258 = vpop.f32.mrf.mxu0
    %v2259 = vadd.f32 %v2246, %v2258
    %v2260 = vpop.f32.mrf.mxu0
    %2261 = vdwg.mxu0
    %2262 = vmatpush.bf16.msra.mxu0 %v1987
    %2263 = vmatpush.bf16.msra.mxu0 %v1980
    %2264 = vmatpush.bf16.msra.mxu0 %v1973
    %2265 = vmatpush.bf16.msra.mxu0 %v1966
    %2266 = vmatpush.bf16.msra.mxu0 %v1959
    %2267 = vmatpush.bf16.msra.mxu0 %v1952
    %2268 = vmatpush.bf16.msra.mxu0 %v1945
    %2269 = vmatpush.bf16.msra.mxu0 %v1938
    %2270 = vmatmul.bf16.gmra.mxu0 %v1436
    %v2271 = vpop.f32.mrf.mxu0
    %v2272 = vadd.f32 %v1572, %v2271
    %v2273 = vpop.f32.mrf.mxu0
    %2274 = vdwg.mxu0
    %2275 = vmatpush.bf16.msra.mxu0 %v2043
    %2276 = vmatpush.bf16.msra.mxu0 %v2036
    %2277 = vmatpush.bf16.msra.mxu0 %v2029
    %2278 = vmatpush.bf16.msra.mxu0 %v2022
    %2279 = vmatpush.bf16.msra.mxu0 %v2015
    %2280 = vmatpush.bf16.msra.mxu0 %v2008
    %2281 = vmatpush.bf16.msra.mxu0 %v2001
    %2282 = vmatpush.bf16.msra.mxu0 %v1994
    %2283 = vmatmul.bf16.gmra.mxu0 %v1437
    %v2284 = vpop.f32.mrf.mxu0
    %v2285 = vadd.f32 %v2272, %v2284
    %v2286 = vpop.f32.mrf.mxu0
    %2287 = vdwg.mxu0
    %2288 = vmatpush.bf16.msra.mxu0 %v1988
    %2289 = vmatpush.bf16.msra.mxu0 %v1981
    %2290 = vmatpush.bf16.msra.mxu0 %v1974
    %2291 = vmatpush.bf16.msra.mxu0 %v1967
    %2292 = vmatpush.bf16.msra.mxu0 %v1960
    %2293 = vmatpush.bf16.msra.mxu0 %v1953
    %2294 = vmatpush.bf16.msra.mxu0 %v1946
    %2295 = vmatpush.bf16.msra.mxu0 %v1939
    %2296 = vmatmul.bf16.gmra.mxu0 %v1436
    %v2297 = vpop.f32.mrf.mxu0
    %v2298 = vadd.f32 %v1573, %v2297
    %v2299 = vpop.f32.mrf.mxu0
    %2300 = vdwg.mxu0
    %2301 = vmatpush.bf16.msra.mxu0 %v2044
    %2302 = vmatpush.bf16.msra.mxu0 %v2037
    %2303 = vmatpush.bf16.msra.mxu0 %v2030
    %2304 = vmatpush.bf16.msra.mxu0 %v2023
    %2305 = vmatpush.bf16.msra.mxu0 %v2016
    %2306 = vmatpush.bf16.msra.mxu0 %v2009
    %2307 = vmatpush.bf16.msra.mxu0 %v2002
    %2308 = vmatpush.bf16.msra.mxu0 %v1995
    %2309 = vmatmul.bf16.gmra.mxu0 %v1437
    %v2310 = vpop.f32.mrf.mxu0
    %v2311 = vadd.f32 %v2298, %v2310
    %v2312 = vpop.f32.mrf.mxu0
    %2313 = vdwg.mxu0
    %2314 = vmatpush.bf16.msra.mxu0 %v1989
    %2315 = vmatpush.bf16.msra.mxu0 %v1982
    %2316 = vmatpush.bf16.msra.mxu0 %v1975
    %2317 = vmatpush.bf16.msra.mxu0 %v1968
    %2318 = vmatpush.bf16.msra.mxu0 %v1961
    %2319 = vmatpush.bf16.msra.mxu0 %v1954
    %2320 = vmatpush.bf16.msra.mxu0 %v1947
    %2321 = vmatpush.bf16.msra.mxu0 %v1940
    %2322 = vmatmul.bf16.gmra.mxu0 %v1436
    %v2323 = vpop.f32.mrf.mxu0
    %v2324 = vadd.f32 %v1574, %v2323
    %v2325 = vpop.f32.mrf.mxu0
    %2326 = vdwg.mxu0
    %2327 = vmatpush.bf16.msra.mxu0 %v2045
    %2328 = vmatpush.bf16.msra.mxu0 %v2038
    %2329 = vmatpush.bf16.msra.mxu0 %v2031
    %2330 = vmatpush.bf16.msra.mxu0 %v2024
    %2331 = vmatpush.bf16.msra.mxu0 %v2017
    %2332 = vmatpush.bf16.msra.mxu0 %v2010
    %2333 = vmatpush.bf16.msra.mxu0 %v2003
    %2334 = vmatpush.bf16.msra.mxu0 %v1996
    %2335 = vmatmul.bf16.gmra.mxu0 %v1437
    %v2336 = vpop.f32.mrf.mxu0
    %v2337 = vadd.f32 %v2324, %v2336
    %v2338 = vpop.f32.mrf.mxu0
    %2339 = vdwg.mxu0
    %v2340 = vxor.u32 %v2181, 2147483648
    %v2341 = vxor.u32 %v2207, 2147483648
    %v2342 = vxor.u32 %v2233, 2147483648
    %v2343 = vxor.u32 %v2259, 2147483648
    %v2344 = vxor.u32 %v2285, 2147483648
    %v2345 = vxor.u32 %v2311, 2147483648
    %v2346 = vxor.u32 %v2337, 2147483648
    %v2347 = vmul.f32 %v2340, 1.442695
    %v2348 = vpow.pop %v2347
    %v2349 = vmul.f32 %v2341, 1.442695
    %v2350 = vpow.pop %v2349
    %v2351 = vmul.f32 %v2342, 1.442695
    %v2352 = vpow.pop %v2351
    %v2353 = vmul.f32 %v2343, 1.442695
    %v2354 = vpow.pop %v2353
    %v2355 = vmul.f32 %v2344, 1.442695
    %v2356 = vpow.pop %v2355
    %v2357 = vmul.f32 %v2345, 1.442695
    %v2358 = vpow.pop %v2357
    %v2359 = vmul.f32 %v2346, 1.442695
    %v2360 = vpow.pop %v2359
    %v2361 = vadd.f32 %v2348, 1.0
    %v2362 = vadd.f32 %v2350, 1.0
    %v2363 = vadd.f32 %v2352, 1.0
    %v2364 = vadd.f32 %v2354, 1.0
    %v2365 = vadd.f32 %v2356, 1.0
    %v2366 = vadd.f32 %v2358, 1.0
    %v2367 = vadd.f32 %v2360, 1.0
    %v2368 = vrcp.pop %v2361
    %v2369 = vmul.f32 %v2361, %v2368
    %v2370 = vsub.f32 1.0, %v2369
    %v2371 = vmul.f32 %v2368, %v2370
    %v2372 = vadd.f32 %v2368, %v2371
    %vm2373 = vweird.f32 %v2361
    %vm2374 = vweird.f32 %v2368
    %vm2375 = vmor %vm2373, %vm2374
    %v2376 = vsel %vm2375, %v2368, %v2372
    %v2377 = vand.u32 2147483647, %v2361
    %vm2378 = vcmp.eq.f32.partialorder %v2377, 8.507059e+37
    %v2379 = vand.u32 %v2361, 2147483648
    %v2380 = vor.u32 1.1754944e-38, %v2379
    %v2381 = vsel %vm2378, %v2380, %v2376
    %v2382 = vmul.f32 1.0, %v2381
    %v2383 = vrcp.pop %v2362
    %v2384 = vmul.f32 %v2362, %v2383
    %v2385 = vsub.f32 1.0, %v2384
    %v2386 = vmul.f32 %v2383, %v2385
    %v2387 = vadd.f32 %v2383, %v2386
    %vm2388 = vweird.f32 %v2362
    %vm2389 = vweird.f32 %v2383
    %vm2390 = vmor %vm2388, %vm2389
    %v2391 = vsel %vm2390, %v2383, %v2387
    %v2392 = vand.u32 2147483647, %v2362
    %vm2393 = vcmp.eq.f32.partialorder %v2392, 8.507059e+37
    %v2394 = vand.u32 %v2362, 2147483648
    %v2395 = vor.u32 1.1754944e-38, %v2394
    %v2396 = vsel %vm2393, %v2395, %v2391
    %v2397 = vmul.f32 1.0, %v2396
    %v2398 = vrcp.pop %v2363
    %v2399 = vmul.f32 %v2363, %v2398
    %v2400 = vsub.f32 1.0, %v2399
    %v2401 = vmul.f32 %v2398, %v2400
    %v2402 = vadd.f32 %v2398, %v2401
    %vm2403 = vweird.f32 %v2363
    %vm2404 = vweird.f32 %v2398
    %vm2405 = vmor %vm2403, %vm2404
    %v2406 = vsel %vm2405, %v2398, %v2402
    %v2407 = vand.u32 2147483647, %v2363
    %vm2408 = vcmp.eq.f32.partialorder %v2407, 8.507059e+37
    %v2409 = vand.u32 %v2363, 2147483648
    %v2410 = vor.u32 1.1754944e-38, %v2409
    %v2411 = vsel %vm2408, %v2410, %v2406
    %v2412 = vmul.f32 1.0, %v2411
    %v2413 = vrcp.pop %v2364
    %v2414 = vmul.f32 %v2364, %v2413
    %v2415 = vsub.f32 1.0, %v2414
    %v2416 = vmul.f32 %v2413, %v2415
    %v2417 = vadd.f32 %v2413, %v2416
    %vm2418 = vweird.f32 %v2364
    %vm2419 = vweird.f32 %v2413
    %vm2420 = vmor %vm2418, %vm2419
    %v2421 = vsel %vm2420, %v2413, %v2417
    %v2422 = vand.u32 2147483647, %v2364
    %vm2423 = vcmp.eq.f32.partialorder %v2422, 8.507059e+37
    %v2424 = vand.u32 %v2364, 2147483648
    %v2425 = vor.u32 1.1754944e-38, %v2424
    %v2426 = vsel %vm2423, %v2425, %v2421
    %v2427 = vmul.f32 1.0, %v2426
    %v2428 = vrcp.pop %v2365
    %v2429 = vmul.f32 %v2365, %v2428
    %v2430 = vsub.f32 1.0, %v2429
    %v2431 = vmul.f32 %v2428, %v2430
    %v2432 = vadd.f32 %v2428, %v2431
    %vm2433 = vweird.f32 %v2365
    %vm2434 = vweird.f32 %v2428
    %vm2435 = vmor %vm2433, %vm2434
    %v2436 = vsel %vm2435, %v2428, %v2432
    %v2437 = vand.u32 2147483647, %v2365
    %vm2438 = vcmp.eq.f32.partialorder %v2437, 8.507059e+37
    %v2439 = vand.u32 %v2365, 2147483648
    %v2440 = vor.u32 1.1754944e-38, %v2439
    %v2441 = vsel %vm2438, %v2440, %v2436
    %v2442 = vmul.f32 1.0, %v2441
    %v2443 = vrcp.pop %v2366
    %v2444 = vmul.f32 %v2366, %v2443
    %v2445 = vsub.f32 1.0, %v2444
    %v2446 = vmul.f32 %v2443, %v2445
    %v2447 = vadd.f32 %v2443, %v2446
    %vm2448 = vweird.f32 %v2366
    %vm2449 = vweird.f32 %v2443
    %vm2450 = vmor %vm2448, %vm2449
    %v2451 = vsel %vm2450, %v2443, %v2447
    %v2452 = vand.u32 2147483647, %v2366
    %vm2453 = vcmp.eq.f32.partialorder %v2452, 8.507059e+37
    %v2454 = vand.u32 %v2366, 2147483648
    %v2455 = vor.u32 1.1754944e-38, %v2454
    %v2456 = vsel %vm2453, %v2455, %v2451
    %v2457 = vmul.f32 1.0, %v2456
    %v2458 = vrcp.pop %v2367
    %v2459 = vmul.f32 %v2367, %v2458
    %v2460 = vsub.f32 1.0, %v2459
    %v2461 = vmul.f32 %v2458, %v2460
    %v2462 = vadd.f32 %v2458, %v2461
    %vm2463 = vweird.f32 %v2367
    %vm2464 = vweird.f32 %v2458
    %vm2465 = vmor %vm2463, %vm2464
    %v2466 = vsel %vm2465, %v2458, %v2462
    %v2467 = vand.u32 2147483647, %v2367
    %vm2468 = vcmp.eq.f32.partialorder %v2467, 8.507059e+37
    %v2469 = vand.u32 %v2367, 2147483648
    %v2470 = vor.u32 1.1754944e-38, %v2469
    %v2471 = vsel %vm2468, %v2470, %v2466
    %v2472 = vmul.f32 1.0, %v2471
    %2473 = vst [vmem:[#allocation17] sm:$0xff] %v2382
    %2474 = vst [vmem:[#allocation17 + $0x8] sm:$0xff] %v2397
    %2475 = vst [vmem:[#allocation17 + $0x10] sm:$0xff] %v2412
    %2476 = vst [vmem:[#allocation17 + $0x18] sm:$0xff] %v2427
    %2477 = vst [vmem:[#allocation17 + $0x20] sm:$0xff] %v2442
    %2478 = vst [vmem:[#allocation17 + $0x28] sm:$0xff] %v2457
    %2479 = vst [vmem:[#allocation17 + $0x30] sm:$0xff] %v2472
    // Predicated region
    $region78: #{tpu_custom_call.1} parent=1 // pred_check
      _
    $region79: #{tpu_custom_call.1} parent=1 // pred_check_branch
      %2481 = sbr.rel (0) target = $region81
    $region80: #{tpu_custom_call.1} parent=1 // pred_region
      %2483 = vsyncadd [#allocation4], 0
      %s2485 = sshll.u32 [#allocation17], 4
      %s2486 = int_to_ptr.vmem [resolvable:$true] %s2485
      %s2487 = sshll.u32 %s10, 4
      %s2488 = int_to_ptr.hbm [resolvable:$true] %s2487
      %2490 = dma.vmem_to_hbm [thread:$0]  %s2486, 896, %s2488, [#allocation4]
    $region81: #{tpu_custom_call.1} parent=1 // pred_fallthru
      _
    // Predicated region
    $region82: #{tpu_custom_call.1} parent=1 // pred_check
      _
    $region83: #{tpu_custom_call.1} parent=1 // pred_check_branch
      %2492 = sbr.rel (0) target = $region85
    $region84: #{tpu_custom_call.1} parent=1 // pred_region
      %2494 = vsyncadd [#allocation19], 0
      %s2496 = sshll.u32 [#allocation18], 4
      %s2497 = int_to_ptr.vmem [resolvable:$true] %s2496
      %s2498 = sshll.u32 %s11, 4
      %s2499 = int_to_ptr.hbm [resolvable:$true] %s2498
      %2501 = dma.vmem_to_hbm [thread:$0]  %s2497, 256, %s2499, [#allocation19]
    $region85: #{tpu_custom_call.1} parent=1 // pred_fallthru
      _
    // Predicated region
    $region86: #{tpu_custom_call.1} parent=1 // pred_check
      _
    $region87: #{tpu_custom_call.1} parent=1 // pred_check_branch
      %2503 = sbr.rel (0) target = $region89
    $region88: #{tpu_custom_call.1} parent=1 // pred_region
      %2505 = dma.done [#allocation4], 896
    $region89: #{tpu_custom_call.1} parent=1 // pred_fallthru
      _
    // Predicated region
    $region90: #{tpu_custom_call.1} parent=1 // pred_check
      _
    $region91: #{tpu_custom_call.1} parent=1 // pred_check_branch
      %2507 = sbr.rel (0) target = $region93
    $region92: #{tpu_custom_call.1} parent=1 // pred_region
      %2509 = dma.done [#allocation19], 256
    $region93: #{tpu_custom_call.1} parent=1 // pred_fallthru
      _
    %2510 = vsyncpa [#allocation3], 1
    %2511 = vsyncpa [#allocation6], 1
    %2512 = vsyncpa [#allocation9], 1
    %2513 = vsyncpa [#allocation12], 1
    %2514 = vsyncpa [#allocation15], 1
    %2515 = vsyncpa [#allocation4], 1
    %2516 = vsyncpa [#allocation19], 1

</llo_original>
